<compile_context>
chip_gen: v6e
topology: v6e:2x2x1
jax: 0.10.0
libtpu: 0.0.40
codegen_flags: <defaults>
</compile_context>

<pallas_src>
import functools
import math

import jax
import jax.numpy as jnp
from jax.experimental import pallas as pl
from jax.experimental.pallas import tpu as pltpu


# ---------------------------------------------------------------------------
# Fused kernel: per batch b
#   q2 = Q_b @ Wq* + bq*        (scale folded into Wq*, bq*)
#   k2 = K_b @ Wk  + bk
#   v2 = V_b @ Wv  + bv
#   for each head h:
#       s    = q2_h @ k2_h^T ; s = where(mask, -1e9, s) ; attn = softmax(s)
#       y   += (attn @ v2_h) @ Wo_h
#   y += b_o + Q_b (residual) ; out = LayerNorm(y) * gamma + beta
# ---------------------------------------------------------------------------
def _mha_fused_kernel(q_ref, k_ref, v_ref, m_ref, w_ref, b_ref, wo_ref, bo_ref,
                      g_ref, beta_ref, o_ref, *, n_heads, d_k, d_v,
                      compute_dtype):
    x_q32 = q_ref[0]                               # (S, d_model) f32 (residual)
    x_q = x_q32.astype(compute_dtype)
    x_k = k_ref[0]                                 # (S, d_model) compute dtype
    x_v = v_ref[0]

    # Fused QKV projections (weights resident in VMEM), f32 accumulation.
    q2 = (jnp.dot(x_q, w_ref[0], preferred_element_type=jnp.float32)
          + b_ref[0]).astype(compute_dtype)        # (S, H*d_k) scale folded in
    k2 = (jnp.dot(x_k, w_ref[1], preferred_element_type=jnp.float32)
          + b_ref[1]).astype(compute_dtype)        # (S, H*d_k)
    v2 = (jnp.dot(x_v, w_ref[2], preferred_element_type=jnp.float32)
          + b_ref[2]).astype(compute_dtype)        # (S, H*d_v)

    masked = m_ref[0] != 0                         # (S, S) bool, nonzero == masked

    # residual + dense bias, accumulated in f32
    y = x_q32 + bo_ref[...]                        # (S, d_model)

    for h in range(n_heads):
        qh = q2[:, h * d_k:(h + 1) * d_k]          # (S, d_k)
        kh = k2[:, h * d_k:(h + 1) * d_k]
        vh = v2[:, h * d_v:(h + 1) * d_v]          # (S, d_v)

        # contract last axes of both (no explicit transpose of K)
        s = jax.lax.dot_general(qh, kh, (((1,), (1,)), ((), ())),
                                preferred_element_type=jnp.float32)   # (S, S)
        s = jnp.where(masked, jnp.float32(-1.0e9), s)

        mx = jnp.max(s, axis=-1, keepdims=True)
        p = jnp.exp(s - mx)
        denom = jnp.sum(p, axis=-1, keepdims=True)
        attn = p * (1.0 / denom)                   # f32 softmax
        # TODO(synk): dropout(0.3) on attn omitted (eval-mode identity).

        ctx = jnp.dot(attn.astype(compute_dtype), vh,
                      preferred_element_type=jnp.float32)             # (S, d_v)

        wo_h = wo_ref[h * d_v:(h + 1) * d_v, :]                       # (d_v, d_model)
        y = y + jnp.dot(ctx.astype(wo_h.dtype), wo_h,
                        preferred_element_type=jnp.float32)

    # LayerNorm (biased variance, eps=1e-5, affine), all in f32
    mean = jnp.mean(y, axis=-1, keepdims=True)
    var = jnp.mean((y - mean) ** 2, axis=-1, keepdims=True)
    norm = (y - mean) * jax.lax.rsqrt(var + 1e-5)
    o_ref[0] = norm * g_ref[...] + beta_ref[...]


# ---------------------------------------------------------------------------
# Full module forward
# ---------------------------------------------------------------------------
def multi_head_attention(params, Q, K, V, attn_mask, n_heads, d_k, d_v,
                         compute_dtype=jnp.float32):
    assert d_k == d_v, "fused QKV path assumes d_k == d_v (module default 64)"
    B, S, d_model = Q.shape
    N = n_heads * d_k
    scale = 1.0 / math.sqrt(64.0)   # hard-coded in the torch module

    # Fold the attention score scale into the Q projection (free, exact-enough).
    wq = params["wq"] * scale
    bq = params["bq"] * scale
    w_stack = jnp.stack([wq, params["wk"], params["wv"]]).astype(compute_dtype)
    b_stack = jnp.stack([bq, params["bk"], params["bv"]])[:, None, :].astype(jnp.float32)

    kernel = functools.partial(_mha_fused_kernel, n_heads=n_heads, d_k=d_k,
                               d_v=d_v, compute_dtype=compute_dtype)

    return pl.pallas_call(
        kernel,
        out_shape=jax.ShapeDtypeStruct((B, S, d_model), jnp.float32),
        grid=(B,),
        in_specs=[
            pl.BlockSpec((1, S, d_model), lambda b: (b, 0, 0)),    # Q (f32: matmul + residual)
            pl.BlockSpec((1, S, d_model), lambda b: (b, 0, 0)),    # K (compute dtype)
            pl.BlockSpec((1, S, d_model), lambda b: (b, 0, 0)),    # V (compute dtype)
            pl.BlockSpec((1, S, S), lambda b: (b, 0, 0)),          # mask, int8
            pl.BlockSpec((3, d_model, N), lambda b: (0, 0, 0)),    # W_qkv  (resident)
            pl.BlockSpec((3, 1, N), lambda b: (0, 0, 0)),          # b_qkv  (resident)
            pl.BlockSpec((N, d_model), lambda b: (0, 0)),          # Wo     (resident)
            pl.BlockSpec((1, d_model), lambda b: (0, 0)),          # b_o
            pl.BlockSpec((1, d_model), lambda b: (0, 0)),          # ln gamma
            pl.BlockSpec((1, d_model), lambda b: (0, 0)),          # ln beta
        ],
        out_specs=pl.BlockSpec((1, S, d_model), lambda b: (b, 0, 0)),
        compiler_params=pltpu.CompilerParams(
            dimension_semantics=("parallel",)),
    )(Q.astype(jnp.float32),
      K.astype(compute_dtype),
      V.astype(compute_dtype),
      attn_mask.astype(jnp.int8),
      w_stack, b_stack,
      params["wo"].astype(compute_dtype),
      params["bo"].reshape(1, d_model).astype(jnp.float32),
      params["ln_g"].reshape(1, d_model).astype(jnp.float32),
      params["ln_b"].reshape(1, d_model).astype(jnp.float32))


# ---------------------------------------------------------------------------
# Pure-JAX reference (module-faithful, for correctness check)
# ---------------------------------------------------------------------------
def reference(params, Q, K, V, attn_mask, n_heads, d_k, d_v):
    B, S, d_model = Q.shape

    def proj(x, w, b):
        return (x @ w + b).reshape(B, S, n_heads, -1).transpose(0, 2, 1, 3)

    q_s = proj(Q, params["wq"], params["bq"])
    k_s = proj(K, params["wk"], params["bk"])
    v_s = proj(V, params["wv"], params["bv"])
    scores = jnp.einsum("bhqd,bhkd->bhqk", q_s, k_s) / math.sqrt(64.0)
    scores = jnp.where(attn_mask[:, None, :, :], -1.0e9, scores)
    attn = jax.nn.softmax(scores, axis=-1)
    ctx = jnp.einsum("bhqk,bhkd->bhqd", attn, v_s)
    ctx = ctx.transpose(0, 2, 1, 3).reshape(B, S, n_heads * d_v)
    y = ctx @ params["wo"] + params["bo"] + Q
    mean = jnp.mean(y, axis=-1, keepdims=True)
    var = jnp.mean((y - mean) ** 2, axis=-1, keepdims=True)
    return (y - mean) / jnp.sqrt(var + 1e-5) * params["ln_g"] + params["ln_b"]


if __name__ == "__main__":
    # Small shapes consistent with the module (d_k = d_v = 64 kept, since the
    # module hard-codes the 1/sqrt(64) score scaling).
    B, S = 2, 8
    n_heads, d_k, d_v = 2, 64, 64
    d_model = 128

    key = jax.random.PRNGKey(0)
    ks = jax.random.split(key, 10)

    def w_init(k, shape):
        return jax.random.normal(k, shape, dtype=jnp.float32) * 0.02

    params = {
        "wq": w_init(ks[0], (d_model, n_heads * d_k)),
        "bq": jnp.zeros((n_heads * d_k,), jnp.float32),
        "wk": w_init(ks[1], (d_model, n_heads * d_k)),
        "bk": jnp.zeros((n_heads * d_k,), jnp.float32),
        "wv": w_init(ks[2], (d_model, n_heads * d_v)),
        "bv": jnp.zeros((n_heads * d_v,), jnp.float32),
        "wo": w_init(ks[3], (n_heads * d_v, d_model)),
        "bo": jnp.zeros((d_model,), jnp.float32),
        "ln_g": jnp.ones((d_model,), jnp.float32),
        "ln_b": jnp.zeros((d_model,), jnp.float32),
    }

    Q = jax.random.normal(ks[4], (B, S, d_model), dtype=jnp.float32)
    K = jax.random.normal(ks[5], (B, S, d_model), dtype=jnp.float32)
    V = jax.random.normal(ks[6], (B, S, d_model), dtype=jnp.float32)

    # Key-padding style mask broadcast to (B, S, S): True == masked.
    valid_len = S - 2
    key_mask = jnp.arange(S) >= valid_len                  # (S,)
    attn_mask = jnp.broadcast_to(key_mask[None, None, :], (B, S, S))

    ref = reference(params, Q, K, V, attn_mask, n_heads, d_k, d_v)

    # f32 path (exact-ish vs reference)
    out = multi_head_attention(params, Q, K, V, attn_mask, n_heads, d_k, d_v)
    out = jax.block_until_ready(out)
    assert out.shape == (B, S, d_model)
    assert jnp.allclose(out, ref, atol=2e-4, rtol=2e-4), "f32 mismatch vs reference"

    # bf16-operand / f32-accumulate path (the v6e/v7x MXU fast path)
    out_bf16 = multi_head_attention(params, Q, K, V, attn_mask, n_heads, d_k, d_v,
                                    compute_dtype=jnp.bfloat16)
    out_bf16 = jax.block_until_ready(out_bf16)
    assert jnp.allclose(out_bf16, ref, atol=1e-1, rtol=1e-1), "bf16 mismatch vs reference"

    print("KERNEL_OK")
</pallas_src>

<mosaic_0001>
module attributes {stable_mosaic.version = 11 : i64} {
  func.func @_mha_fused_kernel(%arg0: i32, %arg1: memref<1x8x128xf32, #tpu.memory_space<vmem>>, %arg2: memref<1x8x128xf32, #tpu.memory_space<vmem>>, %arg3: memref<1x8x128xf32, #tpu.memory_space<vmem>>, %arg4: memref<1x8x8xi8, #tpu.memory_space<vmem>>, %arg5: memref<3x128x128xf32, #tpu.memory_space<vmem>>, %arg6: memref<3x1x128xf32, #tpu.memory_space<vmem>>, %arg7: memref<128x128xf32, #tpu.memory_space<vmem>>, %arg8: memref<1x128xf32, #tpu.memory_space<vmem>>, %arg9: memref<1x128xf32, #tpu.memory_space<vmem>>, %arg10: memref<1x128xf32, #tpu.memory_space<vmem>>, %arg11: memref<1x8x128xf32, #tpu.memory_space<vmem>>) attributes {dimension_semantics = [#tpu.dimension_semantics<parallel>], iteration_bounds = array<i64: 2>, scalar_prefetch = 0 : i64, scratch_operands = 0 : i64, tpu.core_type = #tpu.core_type<tc>, window_params = [{transform_indices = @transform_0, window_bounds = array<i64: 1, 8, 128>}, {transform_indices = @transform_1, window_bounds = array<i64: 1, 8, 128>}, {transform_indices = @transform_2, window_bounds = array<i64: 1, 8, 128>}, {transform_indices = @transform_3, window_bounds = array<i64: 1, 8, 8>}, {pipeline_mode = #tpu.pipeline_mode<synchronous>, transform_indices = @transform_4, window_bounds = array<i64: 3, 128, 128>}, {pipeline_mode = #tpu.pipeline_mode<synchronous>, transform_indices = @transform_5, window_bounds = array<i64: 3, 1, 128>}, {pipeline_mode = #tpu.pipeline_mode<synchronous>, transform_indices = @transform_6, window_bounds = array<i64: 128, 128>}, {pipeline_mode = #tpu.pipeline_mode<synchronous>, transform_indices = @transform_7, window_bounds = array<i64: 1, 128>}, {pipeline_mode = #tpu.pipeline_mode<synchronous>, transform_indices = @transform_8, window_bounds = array<i64: 1, 128>}, {pipeline_mode = #tpu.pipeline_mode<synchronous>, transform_indices = @transform_9, window_bounds = array<i64: 1, 128>}, {transform_indices = @transform_10, window_bounds = array<i64: 1, 8, 128>}]} {
    %c0 = arith.constant 0 : index
    %c0_0 = arith.constant 0 : index
    %c0_1 = arith.constant 0 : index
    %0 = vector.load %arg1[%c0, %c0_0, %c0_1] : memref<1x8x128xf32, #tpu.memory_space<vmem>>, vector<1x8x128xf32>
    %1 = vector.shape_cast %0 : vector<1x8x128xf32> to vector<8x128xf32>
    %c0_2 = arith.constant 0 : index
    %c0_3 = arith.constant 0 : index
    %c0_4 = arith.constant 0 : index
    %2 = vector.load %arg2[%c0_2, %c0_3, %c0_4] : memref<1x8x128xf32, #tpu.memory_space<vmem>>, vector<1x8x128xf32>
    %3 = vector.shape_cast %2 : vector<1x8x128xf32> to vector<8x128xf32>
    %c0_5 = arith.constant 0 : index
    %c0_6 = arith.constant 0 : index
    %c0_7 = arith.constant 0 : index
    %4 = vector.load %arg3[%c0_5, %c0_6, %c0_7] : memref<1x8x128xf32, #tpu.memory_space<vmem>>, vector<1x8x128xf32>
    %5 = vector.shape_cast %4 : vector<1x8x128xf32> to vector<8x128xf32>
    %c0_8 = arith.constant 0 : index
    %c0_9 = arith.constant 0 : index
    %c0_10 = arith.constant 0 : index
    %6 = vector.load %arg5[%c0_8, %c0_9, %c0_10] : memref<3x128x128xf32, #tpu.memory_space<vmem>>, vector<1x128x128xf32>
    %7 = vector.shape_cast %6 : vector<1x128x128xf32> to vector<128x128xf32>
    %cst = arith.constant dense<0.000000e+00> : vector<8x128xf32>
    %8 = tpu.matmul %1, %7, %cst {dimension_numbers = #tpu.dot_dimension_numbers<[1], [0], [0], [1], [0, 0, 1, 1], [], []>} : vector<8x128xf32>, vector<128x128xf32>, vector<8x128xf32> -> vector<8x128xf32>
    %c0_11 = arith.constant 0 : index
    %c0_12 = arith.constant 0 : index
    %c0_13 = arith.constant 0 : index
    %9 = vector.load %arg6[%c0_11, %c0_12, %c0_13] : memref<3x1x128xf32, #tpu.memory_space<vmem>>, vector<1x1x128xf32>
    %10 = vector.shape_cast %9 : vector<1x1x128xf32> to vector<1x128xf32>
    %11 = vector.broadcast %10 : vector<1x128xf32> to vector<8x128xf32>
    %12 = arith.addf %8, %11 : vector<8x128xf32>
    %c1 = arith.constant 1 : index
    %c0_14 = arith.constant 0 : index
    %c0_15 = arith.constant 0 : index
    %13 = vector.load %arg5[%c1, %c0_14, %c0_15] : memref<3x128x128xf32, #tpu.memory_space<vmem>>, vector<1x128x128xf32>
    %14 = vector.shape_cast %13 : vector<1x128x128xf32> to vector<128x128xf32>
    %cst_16 = arith.constant dense<0.000000e+00> : vector<8x128xf32>
    %15 = tpu.matmul %3, %14, %cst_16 {dimension_numbers = #tpu.dot_dimension_numbers<[1], [0], [0], [1], [0, 0, 1, 1], [], []>} : vector<8x128xf32>, vector<128x128xf32>, vector<8x128xf32> -> vector<8x128xf32>
    %c1_17 = arith.constant 1 : index
    %c0_18 = arith.constant 0 : index
    %c0_19 = arith.constant 0 : index
    %16 = vector.load %arg6[%c1_17, %c0_18, %c0_19] : memref<3x1x128xf32, #tpu.memory_space<vmem>>, vector<1x1x128xf32>
    %17 = vector.shape_cast %16 : vector<1x1x128xf32> to vector<1x128xf32>
    %18 = vector.broadcast %17 : vector<1x128xf32> to vector<8x128xf32>
    %19 = arith.addf %15, %18 : vector<8x128xf32>
    %c2 = arith.constant 2 : index
    %c0_20 = arith.constant 0 : index
    %c0_21 = arith.constant 0 : index
    %20 = vector.load %arg5[%c2, %c0_20, %c0_21] : memref<3x128x128xf32, #tpu.memory_space<vmem>>, vector<1x128x128xf32>
    %21 = vector.shape_cast %20 : vector<1x128x128xf32> to vector<128x128xf32>
    %cst_22 = arith.constant dense<0.000000e+00> : vector<8x128xf32>
    %22 = tpu.matmul %5, %21, %cst_22 {dimension_numbers = #tpu.dot_dimension_numbers<[1], [0], [0], [1], [0, 0, 1, 1], [], []>} : vector<8x128xf32>, vector<128x128xf32>, vector<8x128xf32> -> vector<8x128xf32>
    %c2_23 = arith.constant 2 : index
    %c0_24 = arith.constant 0 : index
    %c0_25 = arith.constant 0 : index
    %23 = vector.load %arg6[%c2_23, %c0_24, %c0_25] : memref<3x1x128xf32, #tpu.memory_space<vmem>>, vector<1x1x128xf32>
    %24 = vector.shape_cast %23 : vector<1x1x128xf32> to vector<1x128xf32>
    %25 = vector.broadcast %24 : vector<1x128xf32> to vector<8x128xf32>
    %26 = arith.addf %22, %25 : vector<8x128xf32>
    %c0_26 = arith.constant 0 : index
    %c0_27 = arith.constant 0 : index
    %c0_28 = arith.constant 0 : index
    %27 = vector.load %arg4[%c0_26, %c0_27, %c0_28] : memref<1x8x8xi8, #tpu.memory_space<vmem>>, vector<1x8x8xi8>
    %28 = vector.shape_cast %27 : vector<1x8x8xi8> to vector<8x8xi8>
    %c0_i8 = arith.constant 0 : i8
    %29 = vector.broadcast %c0_i8 : i8 to vector<8x8xi8>
    %30 = arith.cmpi ne, %28, %29 : vector<8x8xi8>
    %c0_29 = arith.constant 0 : index
    %c0_30 = arith.constant 0 : index
    %31 = vector.load %arg8[%c0_29, %c0_30] : memref<1x128xf32, #tpu.memory_space<vmem>>, vector<1x128xf32>
    %32 = vector.broadcast %31 : vector<1x128xf32> to vector<8x128xf32>
    %33 = arith.addf %1, %32 : vector<8x128xf32>
    %34 = vector.extract_strided_slice %12 {offsets = [0, 0], sizes = [8, 64], strides = [1, 1]} : vector<8x128xf32> to vector<8x64xf32>
    %35 = vector.extract_strided_slice %19 {offsets = [0, 0], sizes = [8, 64], strides = [1, 1]} : vector<8x128xf32> to vector<8x64xf32>
    %36 = vector.extract_strided_slice %26 {offsets = [0, 0], sizes = [8, 64], strides = [1, 1]} : vector<8x128xf32> to vector<8x64xf32>
    %cst_31 = arith.constant dense<0.000000e+00> : vector<8x8xf32>
    %37 = tpu.matmul %34, %35, %cst_31 {dimension_numbers = #tpu.dot_dimension_numbers<[1], [1], [0], [0], [0, 0, 1, 0], [], []>} : vector<8x64xf32>, vector<8x64xf32>, vector<8x8xf32> -> vector<8x8xf32>
    %cst_32 = arith.constant -1.000000e+09 : f32
    %38 = vector.broadcast %cst_32 : f32 to vector<8x8xf32>
    %39 = arith.select %30, %38, %37 : vector<8x8xi1>, vector<8x8xf32>
    %cst_33 = arith.constant dense<0xFF800000> : vector<8xf32>
    %40 = vector.multi_reduction <maximumf>, %39, %cst_33 [1] : vector<8x8xf32> to vector<8xf32>
    %41 = vector.shape_cast %40 : vector<8xf32> to vector<8x1xf32>
    %42 = vector.broadcast %41 : vector<8x1xf32> to vector<8x8xf32>
    %43 = arith.subf %39, %42 : vector<8x8xf32>
    %44 = math.exp %43 : vector<8x8xf32>
    %cst_34 = arith.constant dense<0.000000e+00> : vector<8xf32>
    %45 = vector.multi_reduction <add>, %44, %cst_34 [1] : vector<8x8xf32> to vector<8xf32>
    %46 = vector.shape_cast %45 : vector<8xf32> to vector<8x1xf32>
    %cst_35 = arith.constant 1.000000e+00 : f32
    %47 = vector.broadcast %cst_35 : f32 to vector<8x1xf32>
    %48 = arith.divf %47, %46 : vector<8x1xf32>
    %49 = vector.broadcast %48 : vector<8x1xf32> to vector<8x8xf32>
    %50 = arith.mulf %44, %49 : vector<8x8xf32>
    %cst_36 = arith.constant dense<0.000000e+00> : vector<8x64xf32>
    %51 = tpu.matmul %50, %36, %cst_36 {dimension_numbers = #tpu.dot_dimension_numbers<[1], [0], [0], [1], [0, 0, 1, 1], [], []>} : vector<8x8xf32>, vector<8x64xf32>, vector<8x64xf32> -> vector<8x64xf32>
    %c0_37 = arith.constant 0 : index
    %c0_38 = arith.constant 0 : index
    %52 = vector.load %arg7[%c0_37, %c0_38] : memref<128x128xf32, #tpu.memory_space<vmem>>, vector<64x128xf32>
    %cst_39 = arith.constant dense<0.000000e+00> : vector<8x128xf32>
    %53 = tpu.matmul %51, %52, %cst_39 {dimension_numbers = #tpu.dot_dimension_numbers<[1], [0], [0], [1], [0, 0, 1, 1], [], []>} : vector<8x64xf32>, vector<64x128xf32>, vector<8x128xf32> -> vector<8x128xf32>
    %54 = arith.addf %33, %53 : vector<8x128xf32>
    %55 = vector.extract_strided_slice %12 {offsets = [0, 64], sizes = [8, 64], strides = [1, 1]} : vector<8x128xf32> to vector<8x64xf32>
    %56 = vector.extract_strided_slice %19 {offsets = [0, 64], sizes = [8, 64], strides = [1, 1]} : vector<8x128xf32> to vector<8x64xf32>
    %57 = vector.extract_strided_slice %26 {offsets = [0, 64], sizes = [8, 64], strides = [1, 1]} : vector<8x128xf32> to vector<8x64xf32>
    %cst_40 = arith.constant dense<0.000000e+00> : vector<8x8xf32>
    %58 = tpu.matmul %55, %56, %cst_40 {dimension_numbers = #tpu.dot_dimension_numbers<[1], [1], [0], [0], [0, 0, 1, 0], [], []>} : vector<8x64xf32>, vector<8x64xf32>, vector<8x8xf32> -> vector<8x8xf32>
    %cst_41 = arith.constant -1.000000e+09 : f32
    %59 = vector.broadcast %cst_41 : f32 to vector<8x8xf32>
    %60 = arith.select %30, %59, %58 : vector<8x8xi1>, vector<8x8xf32>
    %cst_42 = arith.constant dense<0xFF800000> : vector<8xf32>
    %61 = vector.multi_reduction <maximumf>, %60, %cst_42 [1] : vector<8x8xf32> to vector<8xf32>
    %62 = vector.shape_cast %61 : vector<8xf32> to vector<8x1xf32>
    %63 = vector.broadcast %62 : vector<8x1xf32> to vector<8x8xf32>
    %64 = arith.subf %60, %63 : vector<8x8xf32>
    %65 = math.exp %64 : vector<8x8xf32>
    %cst_43 = arith.constant dense<0.000000e+00> : vector<8xf32>
    %66 = vector.multi_reduction <add>, %65, %cst_43 [1] : vector<8x8xf32> to vector<8xf32>
    %67 = vector.shape_cast %66 : vector<8xf32> to vector<8x1xf32>
    %cst_44 = arith.constant 1.000000e+00 : f32
    %68 = vector.broadcast %cst_44 : f32 to vector<8x1xf32>
    %69 = arith.divf %68, %67 : vector<8x1xf32>
    %70 = vector.broadcast %69 : vector<8x1xf32> to vector<8x8xf32>
    %71 = arith.mulf %65, %70 : vector<8x8xf32>
    %cst_45 = arith.constant dense<0.000000e+00> : vector<8x64xf32>
    %72 = tpu.matmul %71, %57, %cst_45 {dimension_numbers = #tpu.dot_dimension_numbers<[1], [0], [0], [1], [0, 0, 1, 1], [], []>} : vector<8x8xf32>, vector<8x64xf32>, vector<8x64xf32> -> vector<8x64xf32>
    %c64 = arith.constant 64 : index
    %c0_46 = arith.constant 0 : index
    %73 = vector.load %arg7[%c64, %c0_46] : memref<128x128xf32, #tpu.memory_space<vmem>>, vector<64x128xf32>
    %cst_47 = arith.constant dense<0.000000e+00> : vector<8x128xf32>
    %74 = tpu.matmul %72, %73, %cst_47 {dimension_numbers = #tpu.dot_dimension_numbers<[1], [0], [0], [1], [0, 0, 1, 1], [], []>} : vector<8x64xf32>, vector<64x128xf32>, vector<8x128xf32> -> vector<8x128xf32>
    %75 = arith.addf %54, %74 : vector<8x128xf32>
    %cst_48 = arith.constant dense<0.000000e+00> : vector<8xf32>
    %76 = vector.multi_reduction <add>, %75, %cst_48 [1] : vector<8x128xf32> to vector<8xf32>
    %77 = vector.shape_cast %76 : vector<8xf32> to vector<8x1xf32>
    %cst_49 = arith.constant 1.280000e+02 : f32
    %78 = vector.broadcast %cst_49 : f32 to vector<8x1xf32>
    %79 = arith.divf %77, %78 : vector<8x1xf32>
    %80 = vector.broadcast %79 : vector<8x1xf32> to vector<8x128xf32>
    %81 = arith.subf %75, %80 : vector<8x128xf32>
    %82 = arith.mulf %81, %81 : vector<8x128xf32>
    %cst_50 = arith.constant dense<0.000000e+00> : vector<8xf32>
    %83 = vector.multi_reduction <add>, %82, %cst_50 [1] : vector<8x128xf32> to vector<8xf32>
    %84 = vector.shape_cast %83 : vector<8xf32> to vector<8x1xf32>
    %cst_51 = arith.constant 1.280000e+02 : f32
    %85 = vector.broadcast %cst_51 : f32 to vector<8x1xf32>
    %86 = arith.divf %84, %85 : vector<8x1xf32>
    %87 = vector.broadcast %79 : vector<8x1xf32> to vector<8x128xf32>
    %88 = arith.subf %75, %87 : vector<8x128xf32>
    %cst_52 = arith.constant 9.99999974E-6 : f32
    %89 = vector.broadcast %cst_52 : f32 to vector<8x1xf32>
    %90 = arith.addf %86, %89 : vector<8x1xf32>
    %91 = math.rsqrt %90 : vector<8x1xf32>
    %92 = vector.broadcast %91 : vector<8x1xf32> to vector<8x128xf32>
    %93 = arith.mulf %88, %92 : vector<8x128xf32>
    %c0_53 = arith.constant 0 : index
    %c0_54 = arith.constant 0 : index
    %94 = vector.load %arg9[%c0_53, %c0_54] : memref<1x128xf32, #tpu.memory_space<vmem>>, vector<1x128xf32>
    %95 = vector.broadcast %94 : vector<1x128xf32> to vector<8x128xf32>
    %96 = arith.mulf %93, %95 : vector<8x128xf32>
    %c0_55 = arith.constant 0 : index
    %c0_56 = arith.constant 0 : index
    %97 = vector.load %arg10[%c0_55, %c0_56] : memref<1x128xf32, #tpu.memory_space<vmem>>, vector<1x128xf32>
    %98 = vector.broadcast %97 : vector<1x128xf32> to vector<8x128xf32>
    %99 = arith.addf %96, %98 : vector<8x128xf32>
    %c0_57 = arith.constant 0 : index
    %c0_58 = arith.constant 0 : index
    %c0_59 = arith.constant 0 : index
    %100 = vector.load %arg11[%c0_57, %c0_58, %c0_59] : memref<1x8x128xf32, #tpu.memory_space<vmem>>, vector<1x8x128xf32>
    %101 = vector.shape_cast %100 : vector<1x8x128xf32> to vector<8x128xf32>
    %102 = vector.shape_cast %99 : vector<8x128xf32> to vector<1x8x128xf32>
    tpu.vector_store %arg11[%c0_57, %c0_58, %c0_59], %102 {strides = array<i32>} : memref<1x8x128xf32, #tpu.memory_space<vmem>>, vector<1x8x128xf32>,
    return
  }
  func.func @transform_0(%arg0: i32) -> (i32, i32, i32) {
    %c0_i32 = arith.constant 0 : i32
    %c0_i32_0 = arith.constant 0 : i32
    %c0_i32_1 = arith.constant 0 : i32
    return %arg0, %c0_i32, %c0_i32_0 : i32, i32, i32
  }
  func.func @transform_1(%arg0: i32) -> (i32, i32, i32) {
    %c0_i32 = arith.constant 0 : i32
    %c0_i32_0 = arith.constant 0 : i32
    %c0_i32_1 = arith.constant 0 : i32
    return %arg0, %c0_i32, %c0_i32_0 : i32, i32, i32
  }
  func.func @transform_2(%arg0: i32) -> (i32, i32, i32) {
    %c0_i32 = arith.constant 0 : i32
    %c0_i32_0 = arith.constant 0 : i32
    %c0_i32_1 = arith.constant 0 : i32
    return %arg0, %c0_i32, %c0_i32_0 : i32, i32, i32
  }
  func.func @transform_3(%arg0: i32) -> (i32, i32, i32) {
    %c0_i32 = arith.constant 0 : i32
    %c0_i32_0 = arith.constant 0 : i32
    %c0_i32_1 = arith.constant 0 : i32
    return %arg0, %c0_i32, %c0_i32_0 : i32, i32, i32
  }
  func.func @transform_4(%arg0: i32) -> (i32, i32, i32) {
    %c0_i32 = arith.constant 0 : i32
    %c0_i32_0 = arith.constant 0 : i32
    %c0_i32_1 = arith.constant 0 : i32
    %c0_i32_2 = arith.constant 0 : i32
    return %c0_i32, %c0_i32_0, %c0_i32_1 : i32, i32, i32
  }
  func.func @transform_5(%arg0: i32) -> (i32, i32, i32) {
    %c0_i32 = arith.constant 0 : i32
    %c0_i32_0 = arith.constant 0 : i32
    %c0_i32_1 = arith.constant 0 : i32
    %c0_i32_2 = arith.constant 0 : i32
    return %c0_i32, %c0_i32_0, %c0_i32_1 : i32, i32, i32
  }
  func.func @transform_6(%arg0: i32) -> (i32, i32) {
    %c0_i32 = arith.constant 0 : i32
    %c0_i32_0 = arith.constant 0 : i32
    %c0_i32_1 = arith.constant 0 : i32
    return %c0_i32, %c0_i32_0 : i32, i32
  }
  func.func @transform_7(%arg0: i32) -> (i32, i32) {
    %c0_i32 = arith.constant 0 : i32
    %c0_i32_0 = arith.constant 0 : i32
    %c0_i32_1 = arith.constant 0 : i32
    return %c0_i32, %c0_i32_0 : i32, i32
  }
  func.func @transform_8(%arg0: i32) -> (i32, i32) {
    %c0_i32 = arith.constant 0 : i32
    %c0_i32_0 = arith.constant 0 : i32
    %c0_i32_1 = arith.constant 0 : i32
    return %c0_i32, %c0_i32_0 : i32, i32
  }
  func.func @transform_9(%arg0: i32) -> (i32, i32) {
    %c0_i32 = arith.constant 0 : i32
    %c0_i32_0 = arith.constant 0 : i32
    %c0_i32_1 = arith.constant 0 : i32
    return %c0_i32, %c0_i32_0 : i32, i32
  }
  func.func @transform_10(%arg0: i32) -> (i32, i32, i32) {
    %c0_i32 = arith.constant 0 : i32
    %c0_i32_0 = arith.constant 0 : i32
    %c0_i32_1 = arith.constant 0 : i32
    return %arg0, %c0_i32, %c0_i32_0 : i32, i32, i32
  }
}

</mosaic_0001>

<llo_original>
// kernel: tpu_custom_call.1
$region0: #{tpu_custom_call.1}
  #allocation0 [shape = 'u32[]', space=smem, size = 0x4, offset = 0x4, fixed_abs, tag = 'smem constant byte address 0x4 - core index']
  #allocation1 [shape = 'u32[144,128]{1,0:T(1,128)}', space=vmem, size = 0x12000, scoped, tag = 'internal scratch']
  %s0 = inlined_call_operand.hbm [shape: f32[2,8,128], index: 0, kind: input, shape index: {}]
  %s1 = inlined_call_operand.hbm [shape: f32[2,8,128], index: 1, kind: input, shape index: {}]
  %s2 = inlined_call_operand.hbm [shape: f32[2,8,128], index: 2, kind: input, shape index: {}]
  %s3 = inlined_call_operand.vmem [shape: s8[2,8,8], index: 3, kind: input, shape index: {}]
  %s4 = inlined_call_operand.hbm [shape: f32[3,128,128], index: 4, kind: input, shape index: {}]
  %s5 = inlined_call_operand.vmem [shape: f32[3,1,128], index: 5, kind: input, shape index: {}]
  %s6 = inlined_call_operand.hbm [shape: f32[128,128], index: 6, kind: input, shape index: {}]
  %s7 = inlined_call_operand.vmem [shape: f32[1,128], index: 7, kind: input, shape index: {}]
  %s8 = inlined_call_operand.vmem [shape: f32[1,128], index: 8, kind: input, shape index: {}]
  %s9 = inlined_call_operand.vmem [shape: f32[1,128], index: 9, kind: input, shape index: {}]
  %s10 = inlined_call_operand.hbm [shape: f32[2,8,128], index: 10, kind: output, shape index: {}]
  %s11 = sld [smem:[#allocation0]]
  $region93: #{tpu_custom_call.1} parent=0
    _
  %s13 = ssub.s32 1, %s11
  %s14 = scalar_select 0, %s13, %s11
  $region1: #{tpu_custom_call.1} parent=0
    #allocation2 [shape = 'u8[8192]{0}', space=vmem, size = 0x2000, scoped, tag = 'input window, operand 0']
    #allocation3 [shape = 's32[2]{0}', space=sflag, size = 0x8, scoped, tag = 'scoped memory for tpu_custom_call.1']
    #allocation4 [shape = 's32[2]{0}', space=sflag, size = 0x8, scoped, tag = 'scoped memory for tpu_custom_call.1']
    #allocation5 [shape = 'u8[8192]{0}', space=vmem, size = 0x2000, scoped, tag = 'input window, operand 1']
    #allocation6 [shape = 's32[2]{0}', space=sflag, size = 0x8, scoped, tag = 'scoped memory for tpu_custom_call.1']
    #allocation7 [shape = 'u8[8192]{0}', space=vmem, size = 0x2000, scoped, tag = 'input window, operand 2']
    #allocation8 [shape = 'u8[196608]{0}', space=vmem, size = 0x30000, scoped, tag = 'input window, operand 4, single buffered']
    #allocation9 [shape = 's32[1]{0}', space=sflag, size = 0x4, scoped, tag = 'scoped memory for tpu_custom_call.1']
    #allocation10 [shape = 'u8[65536]{0}', space=vmem, size = 0x10000, scoped, tag = 'input window, operand 6, single buffered']
    #allocation11 [shape = 'u8[8192]{0}', space=vmem, size = 0x2000, scoped, tag = 'output window, operand 0']
    %15 = vsyncpa [#allocation3], 0
    %s16 = scalar_lea.sflag [#allocation3], 1
    %17 = vsyncpa %s16, 0
    %18 = vsyncpa [#allocation6], 0
    %s19 = scalar_lea.sflag [#allocation6], 1
    %20 = vsyncpa %s19, 0
    %21 = vsyncpa [#allocation9], 0
    %22 = vsyncpa [#allocation4], 0
    %s23 = scalar_lea.sflag [#allocation4], 1
    %24 = vsyncpa %s23, 0
    loop: start=0, step=1, limit=4
    $region2: #{tpu_custom_call.1} parent=1 // loop_pre_header
      _
    $region3: #{tpu_custom_call.1} parent=1 // loop_header
      %s26 = sphi 0, %s30
      %p27 = scmp.ge.s32.totalorder %s26, 4
      %s36 = sphi 0, %s38
      %s39 = sphi 0, %s36
      %s40 = sphi 0, %s39
      %s56 = sphi 0, %s40
      %s62 = sphi 0, %s64
      %s65 = sphi 0, %s62
      %s66 = sphi 0, %s65
      %s82 = sphi 0, %s66
      %s88 = sphi 0, %s90
      %s91 = sphi 0, %s88
      %s92 = sphi 0, %s91
      %s108 = sphi 0, %s92
      %s114 = sphi 0, %s116
      %s117 = sphi 0, %s114
      %s118 = sphi 0, %s117
      %s134 = sphi 0, %s118
      %s138 = sphi 0, %s138
      %s140 = sphi 0, %s138
      %s141 = sphi 0, %s140
      %s155 = sphi 0, %s141
      %s159 = sphi 0, %s159
      %s161 = sphi 0, %s159
      %s162 = sphi 0, %s161
      %s176 = sphi 0, %s162
      %s180 = sphi 0, %s180
      %s182 = sphi 0, %s180
      %s183 = sphi 0, %s182
      %s197 = sphi 0, %s183
      %s201 = sphi 0, %s201
      %s203 = sphi 0, %s201
      %s204 = sphi 0, %s203
      %s218 = sphi 0, %s204
      %s222 = sphi 0, %s222
      %s224 = sphi 0, %s222
      %s225 = sphi 0, %s224
      %s239 = sphi 0, %s225
      %s243 = sphi 0, %s243
      %s245 = sphi 0, %s243
      %s246 = sphi 0, %s245
      %s260 = sphi 0, %s246
      %s266 = sphi 0, %s268
      %s269 = sphi 0, %s266
      %s270 = sphi 0, %s269
      %s286 = sphi 0, %s270
    $region4: #{tpu_custom_call.1} parent=1 // loop_header_branch
      %29 = sbr.rel (%p27) target = $region8
    $region5: #{tpu_custom_call.1} parent=1 // loop_body
      %s31 = ssub.s32 %s26, 1
      %s32 = ssub.s32 %s26, 2
      %s33 = sadd.s32 %s26, 1
      %s34 = ssub.s32 %s26, %s33
      %p35 = scmp.eq.s32.totalorder %s34, 0
      %s37 = sadd.s32 %s36, 1
      %s38 = scalar_select %p35, %s36, %s37
      %p41 = pneg %p35
      %p42 = scmp.eq.s32.totalorder %s26, 1
      %p43 = por %p41, %p42
      %p44 = scmp.ne.s32.totalorder %s36, %s39
      %p45 = scmp.eq.s32.totalorder %s26, 0
      %p46 = por %p44, %p45
      %p47 = scmp.ne.s32.totalorder %s36, %s39
      %p48 = scmp.eq.s32.totalorder %s31, 1
      %p49 = por %p47, %p48
      %p50 = scmp.ne.s32.totalorder %s39, %s40
      %p51 = scmp.eq.s32.totalorder %s31, 0
      %p52 = por %p50, %p51
      %p53 = scmp.ne.s32.totalorder %s39, %s40
      %p54 = scmp.eq.s32.totalorder %s32, 1
      %p55 = por %p53, %p54
      %p57 = scmp.ne.s32.totalorder %s40, %s56
      %p58 = scmp.eq.s32.totalorder %s32, 0
      %p59 = por %p57, %p58
      %s60 = ssub.s32 %s26, %s33
      %p61 = scmp.eq.s32.totalorder %s60, 0
      %s63 = sadd.s32 %s62, 1
      %s64 = scalar_select %p61, %s62, %s63
      %p67 = pneg %p61
      %p68 = scmp.eq.s32.totalorder %s26, 1
      %p69 = por %p67, %p68
      %p70 = scmp.ne.s32.totalorder %s62, %s65
      %p71 = scmp.eq.s32.totalorder %s26, 0
      %p72 = por %p70, %p71
      %p73 = scmp.ne.s32.totalorder %s62, %s65
      %p74 = scmp.eq.s32.totalorder %s31, 1
      %p75 = por %p73, %p74
      %p76 = scmp.ne.s32.totalorder %s65, %s66
      %p77 = scmp.eq.s32.totalorder %s31, 0
      %p78 = por %p76, %p77
      %p79 = scmp.ne.s32.totalorder %s65, %s66
      %p80 = scmp.eq.s32.totalorder %s32, 1
      %p81 = por %p79, %p80
      %p83 = scmp.ne.s32.totalorder %s66, %s82
      %p84 = scmp.eq.s32.totalorder %s32, 0
      %p85 = por %p83, %p84
      %s86 = ssub.s32 %s26, %s33
      %p87 = scmp.eq.s32.totalorder %s86, 0
      %s89 = sadd.s32 %s88, 1
      %s90 = scalar_select %p87, %s88, %s89
      %p93 = pneg %p87
      %p94 = scmp.eq.s32.totalorder %s26, 1
      %p95 = por %p93, %p94
      %p96 = scmp.ne.s32.totalorder %s88, %s91
      %p97 = scmp.eq.s32.totalorder %s26, 0
      %p98 = por %p96, %p97
      %p99 = scmp.ne.s32.totalorder %s88, %s91
      %p100 = scmp.eq.s32.totalorder %s31, 1
      %p101 = por %p99, %p100
      %p102 = scmp.ne.s32.totalorder %s91, %s92
      %p103 = scmp.eq.s32.totalorder %s31, 0
      %p104 = por %p102, %p103
      %p105 = scmp.ne.s32.totalorder %s91, %s92
      %p106 = scmp.eq.s32.totalorder %s32, 1
      %p107 = por %p105, %p106
      %p109 = scmp.ne.s32.totalorder %s92, %s108
      %p110 = scmp.eq.s32.totalorder %s32, 0
      %p111 = por %p109, %p110
      %s112 = ssub.s32 %s26, %s33
      %p113 = scmp.eq.s32.totalorder %s112, 0
      %s115 = sadd.s32 %s114, 1
      %s116 = scalar_select %p113, %s114, %s115
      %p119 = pneg %p113
      %p120 = scmp.eq.s32.totalorder %s26, 1
      %p121 = por %p119, %p120
      %p122 = scmp.ne.s32.totalorder %s114, %s117
      %p123 = scmp.eq.s32.totalorder %s26, 0
      %p124 = por %p122, %p123
      %p125 = scmp.ne.s32.totalorder %s114, %s117
      %p126 = scmp.eq.s32.totalorder %s31, 1
      %p127 = por %p125, %p126
      %p128 = scmp.ne.s32.totalorder %s117, %s118
      %p129 = scmp.eq.s32.totalorder %s31, 0
      %p130 = por %p128, %p129
      %p131 = scmp.ne.s32.totalorder %s117, %s118
      %p132 = scmp.eq.s32.totalorder %s32, 1
      %p133 = por %p131, %p132
      %p135 = scmp.ne.s32.totalorder %s118, %s134
      %p136 = scmp.eq.s32.totalorder %s32, 0
      %p137 = por %p135, %p136
      %s139 = sadd.s32 %s138, 1
      %p142 = scmp.eq.s32.totalorder %s26, 1
      %p143 = scmp.ne.s32.totalorder %s138, %s140
      %p144 = scmp.eq.s32.totalorder %s26, 0
      %p145 = por %p143, %p144
      %p146 = scmp.ne.s32.totalorder %s138, %s140
      %p147 = scmp.eq.s32.totalorder %s31, 1
      %p148 = por %p146, %p147
      %p149 = scmp.ne.s32.totalorder %s140, %s141
      %p150 = scmp.eq.s32.totalorder %s31, 0
      %p151 = por %p149, %p150
      %p152 = scmp.ne.s32.totalorder %s140, %s141
      %p153 = scmp.eq.s32.totalorder %s32, 1
      %p154 = por %p152, %p153
      %p156 = scmp.ne.s32.totalorder %s141, %s155
      %p157 = scmp.eq.s32.totalorder %s32, 0
      %p158 = por %p156, %p157
      %s160 = sadd.s32 %s159, 1
      %p163 = scmp.eq.s32.totalorder %s26, 1
      %p164 = scmp.ne.s32.totalorder %s159, %s161
      %p165 = scmp.eq.s32.totalorder %s26, 0
      %p166 = por %p164, %p165
      %p167 = scmp.ne.s32.totalorder %s159, %s161
      %p168 = scmp.eq.s32.totalorder %s31, 1
      %p169 = por %p167, %p168
      %p170 = scmp.ne.s32.totalorder %s161, %s162
      %p171 = scmp.eq.s32.totalorder %s31, 0
      %p172 = por %p170, %p171
      %p173 = scmp.ne.s32.totalorder %s161, %s162
      %p174 = scmp.eq.s32.totalorder %s32, 1
      %p175 = por %p173, %p174
      %p177 = scmp.ne.s32.totalorder %s162, %s176
      %p178 = scmp.eq.s32.totalorder %s32, 0
      %p179 = por %p177, %p178
      %s181 = sadd.s32 %s180, 1
      %p184 = scmp.eq.s32.totalorder %s26, 1
      %p185 = scmp.ne.s32.totalorder %s180, %s182
      %p186 = scmp.eq.s32.totalorder %s26, 0
      %p187 = por %p185, %p186
      %p188 = scmp.ne.s32.totalorder %s180, %s182
      %p189 = scmp.eq.s32.totalorder %s31, 1
      %p190 = por %p188, %p189
      %p191 = scmp.ne.s32.totalorder %s182, %s183
      %p192 = scmp.eq.s32.totalorder %s31, 0
      %p193 = por %p191, %p192
      %p194 = scmp.ne.s32.totalorder %s182, %s183
      %p195 = scmp.eq.s32.totalorder %s32, 1
      %p196 = por %p194, %p195
      %p198 = scmp.ne.s32.totalorder %s183, %s197
      %p199 = scmp.eq.s32.totalorder %s32, 0
      %p200 = por %p198, %p199
      %s202 = sadd.s32 %s201, 1
      %p205 = scmp.eq.s32.totalorder %s26, 1
      %p206 = scmp.ne.s32.totalorder %s201, %s203
      %p207 = scmp.eq.s32.totalorder %s26, 0
      %p208 = por %p206, %p207
      %p209 = scmp.ne.s32.totalorder %s201, %s203
      %p210 = scmp.eq.s32.totalorder %s31, 1
      %p211 = por %p209, %p210
      %p212 = scmp.ne.s32.totalorder %s203, %s204
      %p213 = scmp.eq.s32.totalorder %s31, 0
      %p214 = por %p212, %p213
      %p215 = scmp.ne.s32.totalorder %s203, %s204
      %p216 = scmp.eq.s32.totalorder %s32, 1
      %p217 = por %p215, %p216
      %p219 = scmp.ne.s32.totalorder %s204, %s218
      %p220 = scmp.eq.s32.totalorder %s32, 0
      %p221 = por %p219, %p220
      %s223 = sadd.s32 %s222, 1
      %p226 = scmp.eq.s32.totalorder %s26, 1
      %p227 = scmp.ne.s32.totalorder %s222, %s224
      %p228 = scmp.eq.s32.totalorder %s26, 0
      %p229 = por %p227, %p228
      %p230 = scmp.ne.s32.totalorder %s222, %s224
      %p231 = scmp.eq.s32.totalorder %s31, 1
      %p232 = por %p230, %p231
      %p233 = scmp.ne.s32.totalorder %s224, %s225
      %p234 = scmp.eq.s32.totalorder %s31, 0
      %p235 = por %p233, %p234
      %p236 = scmp.ne.s32.totalorder %s224, %s225
      %p237 = scmp.eq.s32.totalorder %s32, 1
      %p238 = por %p236, %p237
      %p240 = scmp.ne.s32.totalorder %s225, %s239
      %p241 = scmp.eq.s32.totalorder %s32, 0
      %p242 = por %p240, %p241
      %s244 = sadd.s32 %s243, 1
      %p247 = scmp.eq.s32.totalorder %s26, 1
      %p248 = scmp.ne.s32.totalorder %s243, %s245
      %p249 = scmp.eq.s32.totalorder %s26, 0
      %p250 = por %p248, %p249
      %p251 = scmp.ne.s32.totalorder %s243, %s245
      %p252 = scmp.eq.s32.totalorder %s31, 1
      %p253 = por %p251, %p252
      %p254 = scmp.ne.s32.totalorder %s245, %s246
      %p255 = scmp.eq.s32.totalorder %s31, 0
      %p256 = por %p254, %p255
      %p257 = scmp.ne.s32.totalorder %s245, %s246
      %p258 = scmp.eq.s32.totalorder %s32, 1
      %p259 = por %p257, %p258
      %p261 = scmp.ne.s32.totalorder %s246, %s260
      %p262 = scmp.eq.s32.totalorder %s32, 0
      %p263 = por %p261, %p262
      %s264 = ssub.s32 %s26, %s33
      %p265 = scmp.eq.s32.totalorder %s264, 0
      %s267 = sadd.s32 %s266, 1
      %s268 = scalar_select %p265, %s266, %s267
      %p271 = pneg %p265
      %p272 = scmp.eq.s32.totalorder %s26, 1
      %p273 = por %p271, %p272
      %p274 = scmp.ne.s32.totalorder %s266, %s269
      %p275 = scmp.eq.s32.totalorder %s26, 0
      %p276 = por %p274, %p275
      %p277 = scmp.ne.s32.totalorder %s266, %s269
      %p278 = scmp.eq.s32.totalorder %s31, 1
      %p279 = por %p277, %p278
      %p280 = scmp.ne.s32.totalorder %s269, %s270
      %p281 = scmp.eq.s32.totalorder %s31, 0
      %p282 = por %p280, %p281
      %p283 = scmp.ne.s32.totalorder %s269, %s270
      %p284 = scmp.eq.s32.totalorder %s32, 1
      %p285 = por %p283, %p284
      %p287 = scmp.ne.s32.totalorder %s270, %s286
      %p288 = scmp.eq.s32.totalorder %s32, 0
      %p289 = por %p287, %p288
      %p290 = scmp.le.s32.totalorder 1, %s26
      %p291 = scmp.lt.s32.totalorder %s26, 3
      %p292 = pnand %p290, %p291
      %p293 = pneg %p292
      // Predicated region
      $region9: #{tpu_custom_call.1} parent=5 // pred_check
        _
      $region10: #{tpu_custom_call.1} parent=5 // pred_check_branch
        %295 = sbr.rel (%p292) target = $region12
      $region11: #{tpu_custom_call.1} parent=5 // pred_region
        %s296 = ssub.s32 %s26, 1
        // Predicated region
        $region13: #{tpu_custom_call.1} parent=11 // pred_check
          %p297 = pneg %p151
        $region14: #{tpu_custom_call.1} parent=11 // pred_check_branch
          %299 = sbr.rel (%p297) target = $region16
        $region15: #{tpu_custom_call.1} parent=11 // pred_region
          %s301 = ssub.s32 6144, 6144
          %302 = vsyncadd [#allocation9], %s301
          %s303 = sshll.u32 [#allocation8], 4
          %s304 = int_to_ptr.vmem [resolvable:$true] %s303
          %309 = dma.hbm_to_vmem [thread:$0]  %s4, 6144, %s304, [#allocation9], 128, 128, 8
        $region16: #{tpu_custom_call.1} parent=11 // pred_fallthru
          _
        // Predicated region
        $region17: #{tpu_custom_call.1} parent=11 // pred_check
          %p310 = pneg %p172
        $region18: #{tpu_custom_call.1} parent=11 // pred_check_branch
          %312 = sbr.rel (%p310) target = $region20
        $region19: #{tpu_custom_call.1} parent=11 // pred_region
          _
        $region20: #{tpu_custom_call.1} parent=11 // pred_fallthru
          _
        // Predicated region
        $region21: #{tpu_custom_call.1} parent=11 // pred_check
          %p313 = pneg %p193
        $region22: #{tpu_custom_call.1} parent=11 // pred_check_branch
          %315 = sbr.rel (%p313) target = $region24
        $region23: #{tpu_custom_call.1} parent=11 // pred_region
          %s317 = ssub.s32 2048, 2048
          %318 = vsyncadd [#allocation9], %s317
          %s319 = sshll.u32 [#allocation10], 4
          %s320 = int_to_ptr.vmem [resolvable:$true] %s319
          %325 = dma.hbm_to_vmem [thread:$0]  %s6, 2048, %s320, [#allocation9], 128, 128, 8
        $region24: #{tpu_custom_call.1} parent=11 // pred_fallthru
          _
        // Predicated region
        $region25: #{tpu_custom_call.1} parent=11 // pred_check
          %p326 = pneg %p214
        $region26: #{tpu_custom_call.1} parent=11 // pred_check_branch
          %328 = sbr.rel (%p326) target = $region28
        $region27: #{tpu_custom_call.1} parent=11 // pred_region
          _
        $region28: #{tpu_custom_call.1} parent=11 // pred_fallthru
          _
        // Predicated region
        $region29: #{tpu_custom_call.1} parent=11 // pred_check
          %p329 = pneg %p235
        $region30: #{tpu_custom_call.1} parent=11 // pred_check_branch
          %331 = sbr.rel (%p329) target = $region32
        $region31: #{tpu_custom_call.1} parent=11 // pred_region
          _
        $region32: #{tpu_custom_call.1} parent=11 // pred_fallthru
          _
        // Predicated region
        $region33: #{tpu_custom_call.1} parent=11 // pred_check
          %p332 = pneg %p256
        $region34: #{tpu_custom_call.1} parent=11 // pred_check_branch
          %334 = sbr.rel (%p332) target = $region36
        $region35: #{tpu_custom_call.1} parent=11 // pred_region
          _
        $region36: #{tpu_custom_call.1} parent=11 // pred_fallthru
          _
      $region12: #{tpu_custom_call.1} parent=5 // pred_fallthru
        _
      %p335 = scmp.lt.s32.totalorder %s26, 2
      // Predicated region
      $region37: #{tpu_custom_call.1} parent=5 // pred_check
        %p336 = pneg %p335
      $region38: #{tpu_custom_call.1} parent=5 // pred_check_branch
        %338 = sbr.rel (%p336) target = $region40
      $region39: #{tpu_custom_call.1} parent=5 // pred_region
        // Predicated region
        $region41: #{tpu_custom_call.1} parent=39 // pred_check
          %p339 = pneg %p46
        $region42: #{tpu_custom_call.1} parent=39 // pred_check_branch
          %341 = sbr.rel (%p339) target = $region44
        $region43: #{tpu_custom_call.1} parent=39 // pred_region
          %s342 = sand.u32 %s36, 1
          %s343 = scalar_lea.sflag [#allocation3], %s342
          %s344 = sand.u32 %s36, 1
          %s345 = smul.addr %s344, 8
          %s346 = scalar_lea.vmem [#allocation2], %s345
          %s348 = ssub.s32 128, 128
          %349 = vsyncadd %s343, %s348
          %s350 = smul.addr %s26, 128
          %s351 = scalar_lea.hbm %s0, %s350
          %s353 = sshll.u32 %s346, 4
          %s354 = int_to_ptr.vmem [resolvable:$true] %s353
          %356 = dma.hbm_to_vmem [thread:$0]  %s351, 128, %s354, %s343
        $region44: #{tpu_custom_call.1} parent=39 // pred_fallthru
          _
        // Predicated region
        $region45: #{tpu_custom_call.1} parent=39 // pred_check
          %p357 = pneg %p72
        $region46: #{tpu_custom_call.1} parent=39 // pred_check_branch
          %359 = sbr.rel (%p357) target = $region48
        $region47: #{tpu_custom_call.1} parent=39 // pred_region
          %s360 = sand.u32 %s26, 1
          %s361 = scalar_lea.sflag [#allocation6], %s360
          %s362 = sand.u32 %s62, 1
          %s363 = smul.addr %s362, 8
          %s364 = scalar_lea.vmem [#allocation5], %s363
          %s366 = ssub.s32 128, 128
          %367 = vsyncadd %s361, %s366
          %s368 = smul.addr %s26, 128
          %s369 = scalar_lea.hbm %s1, %s368
          %s371 = sshll.u32 %s364, 4
          %s372 = int_to_ptr.vmem [resolvable:$true] %s371
          %374 = dma.hbm_to_vmem [thread:$0]  %s369, 128, %s372, %s361
        $region48: #{tpu_custom_call.1} parent=39 // pred_fallthru
          _
        // Predicated region
        $region49: #{tpu_custom_call.1} parent=39 // pred_check
          %p375 = pneg %p98
        $region50: #{tpu_custom_call.1} parent=39 // pred_check_branch
          %377 = sbr.rel (%p375) target = $region52
        $region51: #{tpu_custom_call.1} parent=39 // pred_region
          %s378 = sand.u32 %s26, 1
          %s379 = scalar_lea.sflag [#allocation6], %s378
          %s380 = sand.u32 %s88, 1
          %s381 = smul.addr %s380, 8
          %s382 = scalar_lea.vmem [#allocation7], %s381
          %s384 = ssub.s32 128, 128
          %385 = vsyncadd %s379, %s384
          %s386 = smul.addr %s26, 128
          %s387 = scalar_lea.hbm %s2, %s386
          %s389 = sshll.u32 %s382, 4
          %s390 = int_to_ptr.vmem [resolvable:$true] %s389
          %392 = dma.hbm_to_vmem [thread:$0]  %s387, 128, %s390, %s379
        $region52: #{tpu_custom_call.1} parent=39 // pred_fallthru
          _
        // Predicated region
        $region53: #{tpu_custom_call.1} parent=39 // pred_check
          %p393 = pneg %p124
        $region54: #{tpu_custom_call.1} parent=39 // pred_check_branch
          %395 = sbr.rel (%p393) target = $region56
        $region55: #{tpu_custom_call.1} parent=39 // pred_region
          %p396 = scmp.lt.s32.totalorder %s26, 1
          %s397 = scalar_select %p396, %s26, 1
          %s398 = smul.addr %s397, 2
          %s399 = scalar_lea.vmem %s3, %s398
        $region56: #{tpu_custom_call.1} parent=39 // pred_fallthru
          _
      $region40: #{tpu_custom_call.1} parent=5 // pred_fallthru
        _
      %p400 = scmp.le.s32.totalorder 1, %s26
      %p401 = scmp.lt.s32.totalorder %s26, 3
      %p402 = pnand %p400, %p401
      %p403 = pneg %p402
      // Predicated region
      $region57: #{tpu_custom_call.1} parent=5 // pred_check
        _
      $region58: #{tpu_custom_call.1} parent=5 // pred_check_branch
        %405 = sbr.rel (%p402) target = $region60
      $region59: #{tpu_custom_call.1} parent=5 // pred_region
        %s406 = ssub.s32 %s26, 1
        %s407 = sand.u32 %s39, 1
        %s408 = scalar_lea.sflag [#allocation3], %s407
        %s409 = sand.u32 %s39, 1
        %s410 = smul.addr %s409, 8
        %s411 = scalar_lea.vmem [#allocation2], %s410
        // Predicated region
        $region61: #{tpu_custom_call.1} parent=59 // pred_check
          %p412 = pneg %p52
        $region62: #{tpu_custom_call.1} parent=59 // pred_check_branch
          %414 = sbr.rel (%p412) target = $region64
        $region63: #{tpu_custom_call.1} parent=59 // pred_region
          %415 = dma.done %s408, 128
        $region64: #{tpu_custom_call.1} parent=59 // pred_fallthru
          _
        %s416 = sand.u32 %s31, 1
        %s417 = scalar_lea.sflag [#allocation6], %s416
        %s418 = sand.u32 %s65, 1
        %s419 = smul.addr %s418, 8
        %s420 = scalar_lea.vmem [#allocation5], %s419
        // Predicated region
        $region65: #{tpu_custom_call.1} parent=59 // pred_check
          %p421 = pneg %p78
        $region66: #{tpu_custom_call.1} parent=59 // pred_check_branch
          %423 = sbr.rel (%p421) target = $region68
        $region67: #{tpu_custom_call.1} parent=59 // pred_region
          %424 = dma.done %s417, 128
        $region68: #{tpu_custom_call.1} parent=59 // pred_fallthru
          _
        %s425 = sand.u32 %s31, 1
        %s426 = scalar_lea.sflag [#allocation6], %s425
        %s427 = sand.u32 %s91, 1
        %s428 = smul.addr %s427, 8
        %s429 = scalar_lea.vmem [#allocation7], %s428
        // Predicated region
        $region69: #{tpu_custom_call.1} parent=59 // pred_check
          %p430 = pneg %p104
        $region70: #{tpu_custom_call.1} parent=59 // pred_check_branch
          %432 = sbr.rel (%p430) target = $region72
        $region71: #{tpu_custom_call.1} parent=59 // pred_region
          %433 = dma.done %s426, 128
        $region72: #{tpu_custom_call.1} parent=59 // pred_fallthru
          _
        // Predicated region
        $region73: #{tpu_custom_call.1} parent=59 // pred_check
          %p434 = pneg %p151
        $region74: #{tpu_custom_call.1} parent=59 // pred_check_branch
          %436 = sbr.rel (%p434) target = $region76
        $region75: #{tpu_custom_call.1} parent=59 // pred_region
          %437 = dma.done [#allocation9], 6144
        $region76: #{tpu_custom_call.1} parent=59 // pred_fallthru
          _
        // Predicated region
        $region77: #{tpu_custom_call.1} parent=59 // pred_check
          %p438 = pneg %p193
        $region78: #{tpu_custom_call.1} parent=59 // pred_check_branch
          %440 = sbr.rel (%p438) target = $region80
        $region79: #{tpu_custom_call.1} parent=59 // pred_region
          %441 = dma.done [#allocation9], 2048
        $region80: #{tpu_custom_call.1} parent=59 // pred_fallthru
          _
        %s442 = sand.u32 %s39, 1
        %s443 = scalar_lea.sflag [#allocation3], %s442
        %s444 = sand.u32 %s39, 1
        %s445 = smul.addr %s444, 8
        %s446 = scalar_lea.vmem [#allocation2], %s445
        %p447 = pneg %p52
        %p448 = pneg %p49
        %s449 = sand.u32 %s31, 1
        %s450 = scalar_lea.sflag [#allocation6], %s449
        %s451 = sand.u32 %s65, 1
        %s452 = smul.addr %s451, 8
        %s453 = scalar_lea.vmem [#allocation5], %s452
        %p454 = pneg %p78
        %p455 = pneg %p75
        %s456 = sand.u32 %s31, 1
        %s457 = scalar_lea.sflag [#allocation6], %s456
        %s458 = sand.u32 %s91, 1
        %s459 = smul.addr %s458, 8
        %s460 = scalar_lea.vmem [#allocation7], %s459
        %p461 = pneg %p104
        %p462 = pneg %p101
        %p463 = scmp.lt.s32.totalorder %s31, 1
        %s464 = scalar_select %p463, %s31, 1
        %s465 = smul.addr %s464, 2
        %s466 = scalar_lea.vmem %s3, %s465
        %p467 = pneg %p130
        %p468 = pneg %p127
        %p469 = pneg %p151
        %p470 = pneg %p148
        %p471 = pneg %p172
        %p472 = pneg %p169
        %p473 = pneg %p193
        %p474 = pneg %p190
        %p475 = pneg %p214
        %p476 = pneg %p211
        %p477 = pneg %p235
        %p478 = pneg %p232
        %p479 = pneg %p256
        %p480 = pneg %p253
        %p481 = pneg %p282
        %p482 = pneg %p279
        %s483 = sand.u32 %s269, 1
        %s484 = scalar_lea.sflag [#allocation4], %s483
        %s485 = sand.u32 %s269, 1
        %s486 = smul.addr %s485, 8
        %s487 = scalar_lea.vmem [#allocation11], %s486
        %p488 = scmp.lt.s32.totalorder %s31, 1
        %s489 = scalar_select %p488, %s31, 1
        %s490 = smul.addr %s489, 2
        %s491 = scalar_lea.vmem %s3, %s490
        %v494 = vld [vmem:[%s411] sm:$0xff]
        %v495 = vld [vmem:[%s420] sm:$0xff]
        %v496 = vld [vmem:[%s429] sm:$0xff]
        %v497 = vld [vmem:[#allocation8] sm:$0xff]
        %v498 = vld [vmem:[#allocation8 + $0x8] sm:$0xff]
        %v499 = vld [vmem:[#allocation8 + $0x10] sm:$0xff]
        %v500 = vld [vmem:[#allocation8 + $0x18] sm:$0xff]
        %v501 = vld [vmem:[#allocation8 + $0x20] sm:$0xff]
        %v502 = vld [vmem:[#allocation8 + $0x28] sm:$0xff]
        %v503 = vld [vmem:[#allocation8 + $0x30] sm:$0xff]
        %v504 = vld [vmem:[#allocation8 + $0x38] sm:$0xff]
        %v505 = vld [vmem:[#allocation8 + $0x40] sm:$0xff]
        %v506 = vld [vmem:[#allocation8 + $0x48] sm:$0xff]
        %v507 = vld [vmem:[#allocation8 + $0x50] sm:$0xff]
        %v508 = vld [vmem:[#allocation8 + $0x58] sm:$0xff]
        %v509 = vld [vmem:[#allocation8 + $0x60] sm:$0xff]
        %v510 = vld [vmem:[#allocation8 + $0x68] sm:$0xff]
        %v511 = vld [vmem:[#allocation8 + $0x70] sm:$0xff]
        %v512 = vld [vmem:[#allocation8 + $0x78] sm:$0xff]
        %v513 = vld [vmem:[%s5] sm:$0x1]
        %v515 = vlaneseq
        %v516 = vshrl.u32 %v515, 7
        %v517 = vsub.s32 0, %v516
        %v518 = vrot.slane %v513, %v517
        %520 = vmatprep.subr.mxu0 0.0
        %521 = vmatpush1.msra.mxu0 %v512
        %522 = vmatprep.subr.mxu0 0.0
        %523 = vmatpush1.msra.mxu0 %v511
        %524 = vmatprep.subr.mxu0 0.0
        %525 = vmatpush1.msra.mxu0 %v510
        %526 = vmatprep.subr.mxu0 0.0
        %527 = vmatpush1.msra.mxu0 %v509
        %528 = vmatprep.subr.mxu0 0.0
        %529 = vmatpush1.msra.mxu0 %v508
        %530 = vmatprep.subr.mxu0 0.0
        %531 = vmatpush1.msra.mxu0 %v507
        %532 = vmatprep.subr.mxu0 0.0
        %533 = vmatpush1.msra.mxu0 %v506
        %534 = vmatprep.subr.mxu0 0.0
        %535 = vmatpush1.msra.mxu0 %v505
        %536 = vmatprep.subr.mxu0 0.0
        %537 = vmatpush1.msra.mxu0 %v504
        %538 = vmatprep.subr.mxu0 0.0
        %539 = vmatpush1.msra.mxu0 %v503
        %540 = vmatprep.subr.mxu0 0.0
        %541 = vmatpush1.msra.mxu0 %v502
        %542 = vmatprep.subr.mxu0 0.0
        %543 = vmatpush1.msra.mxu0 %v501
        %544 = vmatprep.subr.mxu0 0.0
        %545 = vmatpush1.msra.mxu0 %v500
        %546 = vmatprep.subr.mxu0 0.0
        %547 = vmatpush1.msra.mxu0 %v499
        %548 = vmatprep.subr.mxu0 0.0
        %549 = vmatpush1.msra.mxu0 %v498
        %550 = vmatprep.subr.mxu0 0.0
        %551 = vmatpush1.msra.mxu0 %v497
        %552 = vmatprep.subr.mxu0 0.0
        %553 = vmatpush2.msra.mxu0 0.0
        %554 = vmatprep.subr.mxu0 0.0
        %555 = vmatpush2.msra.mxu0 0.0
        %556 = vmatprep.subr.mxu0 0.0
        %557 = vmatpush2.msra.mxu0 0.0
        %558 = vmatprep.subr.mxu0 0.0
        %559 = vmatpush2.msra.mxu0 0.0
        %560 = vmatprep.subr.mxu0 0.0
        %561 = vmatpush2.msra.mxu0 0.0
        %562 = vmatprep.subr.mxu0 0.0
        %563 = vmatpush2.msra.mxu0 0.0
        %564 = vmatprep.subr.mxu0 0.0
        %565 = vmatpush2.msra.mxu0 0.0
        %566 = vmatprep.subr.mxu0 0.0
        %567 = vmatpush2.msra.mxu0 0.0
        %568 = vmatprep.subr.mxu0 0.0
        %569 = vmatpush2.msra.mxu0 0.0
        %570 = vmatprep.subr.mxu0 0.0
        %571 = vmatpush2.msra.mxu0 0.0
        %572 = vmatprep.subr.mxu0 0.0
        %573 = vmatpush2.msra.mxu0 0.0
        %574 = vmatprep.subr.mxu0 0.0
        %575 = vmatpush2.msra.mxu0 0.0
        %576 = vmatprep.subr.mxu0 0.0
        %577 = vmatpush2.msra.mxu0 0.0
        %578 = vmatprep.subr.mxu0 0.0
        %579 = vmatpush2.msra.mxu0 0.0
        %580 = vmatprep.subr.mxu0 0.0
        %581 = vmatpush2.msra.mxu0 0.0
        %582 = vmatprep.subr.mxu0 0.0
        %583 = vmatpush2.msra.mxu0 0.0
        %584 = vmatprep.mubr.f32.mxu0 0.0
        %585 = vmatmul.mubr.f32.gmra.mxu0 %v494
        %v586 = vpop.f32.mrf.mxu0
        %v587 = vadd.f32 %v518, %v586
        %v588 = vpop.f32.mrf.mxu0
        %589 = vdwg.mxu0
        %s590 = scalar_lea.vmem [#allocation8], 128
        %v591 = vld [vmem:[%s590] sm:$0xff]
        %v592 = vld [vmem:[%s590 + $0x8] sm:$0xff]
        %v593 = vld [vmem:[%s590 + $0x10] sm:$0xff]
        %v594 = vld [vmem:[%s590 + $0x18] sm:$0xff]
        %v595 = vld [vmem:[%s590 + $0x20] sm:$0xff]
        %v596 = vld [vmem:[%s590 + $0x28] sm:$0xff]
        %v597 = vld [vmem:[%s590 + $0x30] sm:$0xff]
        %v598 = vld [vmem:[%s590 + $0x38] sm:$0xff]
        %v599 = vld [vmem:[%s590 + $0x40] sm:$0xff]
        %v600 = vld [vmem:[%s590 + $0x48] sm:$0xff]
        %v601 = vld [vmem:[%s590 + $0x50] sm:$0xff]
        %v602 = vld [vmem:[%s590 + $0x58] sm:$0xff]
        %v603 = vld [vmem:[%s590 + $0x60] sm:$0xff]
        %v604 = vld [vmem:[%s590 + $0x68] sm:$0xff]
        %v605 = vld [vmem:[%s590 + $0x70] sm:$0xff]
        %v606 = vld [vmem:[%s590 + $0x78] sm:$0xff]
        %s607 = scalar_lea.vmem %s5, 1
        %v608 = vld [vmem:[%s607] sm:$0x1]
        %v610 = vlaneseq
        %v611 = vshrl.u32 %v610, 7
        %v612 = vsub.s32 0, %v611
        %v613 = vrot.slane %v608, %v612
        %615 = vmatprep.subr.mxu0 0.0
        %616 = vmatpush1.msra.mxu0 %v606
        %617 = vmatprep.subr.mxu0 0.0
        %618 = vmatpush1.msra.mxu0 %v605
        %619 = vmatprep.subr.mxu0 0.0
        %620 = vmatpush1.msra.mxu0 %v604
        %621 = vmatprep.subr.mxu0 0.0
        %622 = vmatpush1.msra.mxu0 %v603
        %623 = vmatprep.subr.mxu0 0.0
        %624 = vmatpush1.msra.mxu0 %v602
        %625 = vmatprep.subr.mxu0 0.0
        %626 = vmatpush1.msra.mxu0 %v601
        %627 = vmatprep.subr.mxu0 0.0
        %628 = vmatpush1.msra.mxu0 %v600
        %629 = vmatprep.subr.mxu0 0.0
        %630 = vmatpush1.msra.mxu0 %v599
        %631 = vmatprep.subr.mxu0 0.0
        %632 = vmatpush1.msra.mxu0 %v598
        %633 = vmatprep.subr.mxu0 0.0
        %634 = vmatpush1.msra.mxu0 %v597
        %635 = vmatprep.subr.mxu0 0.0
        %636 = vmatpush1.msra.mxu0 %v596
        %637 = vmatprep.subr.mxu0 0.0
        %638 = vmatpush1.msra.mxu0 %v595
        %639 = vmatprep.subr.mxu0 0.0
        %640 = vmatpush1.msra.mxu0 %v594
        %641 = vmatprep.subr.mxu0 0.0
        %642 = vmatpush1.msra.mxu0 %v593
        %643 = vmatprep.subr.mxu0 0.0
        %644 = vmatpush1.msra.mxu0 %v592
        %645 = vmatprep.subr.mxu0 0.0
        %646 = vmatpush1.msra.mxu0 %v591
        %647 = vmatprep.subr.mxu0 0.0
        %648 = vmatpush2.msra.mxu0 0.0
        %649 = vmatprep.subr.mxu0 0.0
        %650 = vmatpush2.msra.mxu0 0.0
        %651 = vmatprep.subr.mxu0 0.0
        %652 = vmatpush2.msra.mxu0 0.0
        %653 = vmatprep.subr.mxu0 0.0
        %654 = vmatpush2.msra.mxu0 0.0
        %655 = vmatprep.subr.mxu0 0.0
        %656 = vmatpush2.msra.mxu0 0.0
        %657 = vmatprep.subr.mxu0 0.0
        %658 = vmatpush2.msra.mxu0 0.0
        %659 = vmatprep.subr.mxu0 0.0
        %660 = vmatpush2.msra.mxu0 0.0
        %661 = vmatprep.subr.mxu0 0.0
        %662 = vmatpush2.msra.mxu0 0.0
        %663 = vmatprep.subr.mxu0 0.0
        %664 = vmatpush2.msra.mxu0 0.0
        %665 = vmatprep.subr.mxu0 0.0
        %666 = vmatpush2.msra.mxu0 0.0
        %667 = vmatprep.subr.mxu0 0.0
        %668 = vmatpush2.msra.mxu0 0.0
        %669 = vmatprep.subr.mxu0 0.0
        %670 = vmatpush2.msra.mxu0 0.0
        %671 = vmatprep.subr.mxu0 0.0
        %672 = vmatpush2.msra.mxu0 0.0
        %673 = vmatprep.subr.mxu0 0.0
        %674 = vmatpush2.msra.mxu0 0.0
        %675 = vmatprep.subr.mxu0 0.0
        %676 = vmatpush2.msra.mxu0 0.0
        %677 = vmatprep.subr.mxu0 0.0
        %678 = vmatpush2.msra.mxu0 0.0
        %679 = vmatprep.mubr.f32.mxu0 0.0
        %680 = vmatmul.mubr.f32.gmra.mxu0 %v495
        %v681 = vpop.f32.mrf.mxu0
        %v682 = vadd.f32 %v613, %v681
        %v683 = vpop.f32.mrf.mxu0
        %684 = vdwg.mxu0
        %s685 = scalar_lea.vmem [#allocation8], 256
        %v686 = vld [vmem:[%s685] sm:$0xff]
        %v687 = vld [vmem:[%s685 + $0x8] sm:$0xff]
        %v688 = vld [vmem:[%s685 + $0x10] sm:$0xff]
        %v689 = vld [vmem:[%s685 + $0x18] sm:$0xff]
        %v690 = vld [vmem:[%s685 + $0x20] sm:$0xff]
        %v691 = vld [vmem:[%s685 + $0x28] sm:$0xff]
        %v692 = vld [vmem:[%s685 + $0x30] sm:$0xff]
        %v693 = vld [vmem:[%s685 + $0x38] sm:$0xff]
        %v694 = vld [vmem:[%s685 + $0x40] sm:$0xff]
        %v695 = vld [vmem:[%s685 + $0x48] sm:$0xff]
        %v696 = vld [vmem:[%s685 + $0x50] sm:$0xff]
        %v697 = vld [vmem:[%s685 + $0x58] sm:$0xff]
        %v698 = vld [vmem:[%s685 + $0x60] sm:$0xff]
        %v699 = vld [vmem:[%s685 + $0x68] sm:$0xff]
        %v700 = vld [vmem:[%s685 + $0x70] sm:$0xff]
        %v701 = vld [vmem:[%s685 + $0x78] sm:$0xff]
        %s702 = scalar_lea.vmem %s5, 2
        %v703 = vld [vmem:[%s702] sm:$0x1]
        %v705 = vlaneseq
        %v706 = vshrl.u32 %v705, 7
        %v707 = vsub.s32 0, %v706
        %v708 = vrot.slane %v703, %v707
        %710 = vmatprep.subr.mxu0 0.0
        %711 = vmatpush1.msra.mxu0 %v701
        %712 = vmatprep.subr.mxu0 0.0
        %713 = vmatpush1.msra.mxu0 %v700
        %714 = vmatprep.subr.mxu0 0.0
        %715 = vmatpush1.msra.mxu0 %v699
        %716 = vmatprep.subr.mxu0 0.0
        %717 = vmatpush1.msra.mxu0 %v698
        %718 = vmatprep.subr.mxu0 0.0
        %719 = vmatpush1.msra.mxu0 %v697
        %720 = vmatprep.subr.mxu0 0.0
        %721 = vmatpush1.msra.mxu0 %v696
        %722 = vmatprep.subr.mxu0 0.0
        %723 = vmatpush1.msra.mxu0 %v695
        %724 = vmatprep.subr.mxu0 0.0
        %725 = vmatpush1.msra.mxu0 %v694
        %726 = vmatprep.subr.mxu0 0.0
        %727 = vmatpush1.msra.mxu0 %v693
        %728 = vmatprep.subr.mxu0 0.0
        %729 = vmatpush1.msra.mxu0 %v692
        %730 = vmatprep.subr.mxu0 0.0
        %731 = vmatpush1.msra.mxu0 %v691
        %732 = vmatprep.subr.mxu0 0.0
        %733 = vmatpush1.msra.mxu0 %v690
        %734 = vmatprep.subr.mxu0 0.0
        %735 = vmatpush1.msra.mxu0 %v689
        %736 = vmatprep.subr.mxu0 0.0
        %737 = vmatpush1.msra.mxu0 %v688
        %738 = vmatprep.subr.mxu0 0.0
        %739 = vmatpush1.msra.mxu0 %v687
        %740 = vmatprep.subr.mxu0 0.0
        %741 = vmatpush1.msra.mxu0 %v686
        %742 = vmatprep.subr.mxu0 0.0
        %743 = vmatpush2.msra.mxu0 0.0
        %744 = vmatprep.subr.mxu0 0.0
        %745 = vmatpush2.msra.mxu0 0.0
        %746 = vmatprep.subr.mxu0 0.0
        %747 = vmatpush2.msra.mxu0 0.0
        %748 = vmatprep.subr.mxu0 0.0
        %749 = vmatpush2.msra.mxu0 0.0
        %750 = vmatprep.subr.mxu0 0.0
        %751 = vmatpush2.msra.mxu0 0.0
        %752 = vmatprep.subr.mxu0 0.0
        %753 = vmatpush2.msra.mxu0 0.0
        %754 = vmatprep.subr.mxu0 0.0
        %755 = vmatpush2.msra.mxu0 0.0
        %756 = vmatprep.subr.mxu0 0.0
        %757 = vmatpush2.msra.mxu0 0.0
        %758 = vmatprep.subr.mxu0 0.0
        %759 = vmatpush2.msra.mxu0 0.0
        %760 = vmatprep.subr.mxu0 0.0
        %761 = vmatpush2.msra.mxu0 0.0
        %762 = vmatprep.subr.mxu0 0.0
        %763 = vmatpush2.msra.mxu0 0.0
        %764 = vmatprep.subr.mxu0 0.0
        %765 = vmatpush2.msra.mxu0 0.0
        %766 = vmatprep.subr.mxu0 0.0
        %767 = vmatpush2.msra.mxu0 0.0
        %768 = vmatprep.subr.mxu0 0.0
        %769 = vmatpush2.msra.mxu0 0.0
        %770 = vmatprep.subr.mxu0 0.0
        %771 = vmatpush2.msra.mxu0 0.0
        %772 = vmatprep.subr.mxu0 0.0
        %773 = vmatpush2.msra.mxu0 0.0
        %774 = vmatprep.mubr.f32.mxu0 0.0
        %775 = vmatmul.mubr.f32.gmra.mxu0 %v496
        %v776 = vpop.f32.mrf.mxu0
        %v777 = vadd.f32 %v708, %v776
        %v778 = vpop.f32.mrf.mxu0
        %779 = vdwg.mxu0
        %v780 = vld [vmem:[%s491] sm:$0x3]
        %vm781 = vnez %v780
        %v782 = vld [vmem:[%s7] sm:$0x1]
        %v784 = vlaneseq
        %v785 = vshrl.u32 %v784, 7
        %v786 = vsub.s32 0, %v785
        %v787 = vrot.slane %v782, %v786
        %v789 = vadd.f32 %v494, %v787
        %vm790 = vcmask 523264
        %v792 = vsel %vm790, %v587, 0
        %v795 = vsel %vm790, %v682, 0
        %797 = vmatprep.subr.mxu0 0.0
        %798 = vmatpush1.xpose.msra.mxu0 0.0
        %799 = vmatprep.subr.mxu0 0.0
        %800 = vmatpush1.xpose.msra.mxu0 0.0
        %801 = vmatprep.subr.mxu0 0.0
        %802 = vmatpush1.xpose.msra.mxu0 0.0
        %803 = vmatprep.subr.mxu0 0.0
        %804 = vmatpush1.xpose.msra.mxu0 0.0
        %805 = vmatprep.subr.mxu0 0.0
        %806 = vmatpush1.xpose.msra.mxu0 0.0
        %807 = vmatprep.subr.mxu0 0.0
        %808 = vmatpush1.xpose.msra.mxu0 0.0
        %809 = vmatprep.subr.mxu0 0.0
        %810 = vmatpush1.xpose.msra.mxu0 0.0
        %811 = vmatprep.subr.mxu0 0.0
        %812 = vmatpush1.xpose.msra.mxu0 0.0
        %813 = vmatprep.subr.mxu0 0.0
        %814 = vmatpush1.xpose.msra.mxu0 0.0
        %815 = vmatprep.subr.mxu0 0.0
        %816 = vmatpush1.xpose.msra.mxu0 0.0
        %817 = vmatprep.subr.mxu0 0.0
        %818 = vmatpush1.xpose.msra.mxu0 0.0
        %819 = vmatprep.subr.mxu0 0.0
        %820 = vmatpush1.xpose.msra.mxu0 0.0
        %821 = vmatprep.subr.mxu0 0.0
        %822 = vmatpush1.xpose.msra.mxu0 0.0
        %823 = vmatprep.subr.mxu0 0.0
        %824 = vmatpush1.xpose.msra.mxu0 0.0
        %825 = vmatprep.subr.mxu0 0.0
        %826 = vmatpush1.xpose.msra.mxu0 0.0
        %827 = vmatprep.subr.mxu0 0.0
        %828 = vmatpush1.xpose.msra.mxu0 %v795
        %829 = vmatprep.subr.mxu0 0.0
        %830 = vmatpush2.xpose.msra.mxu0 0.0
        %831 = vmatprep.subr.mxu0 0.0
        %832 = vmatpush2.xpose.msra.mxu0 0.0
        %833 = vmatprep.subr.mxu0 0.0
        %834 = vmatpush2.xpose.msra.mxu0 0.0
        %835 = vmatprep.subr.mxu0 0.0
        %836 = vmatpush2.xpose.msra.mxu0 0.0
        %837 = vmatprep.subr.mxu0 0.0
        %838 = vmatpush2.xpose.msra.mxu0 0.0
        %839 = vmatprep.subr.mxu0 0.0
        %840 = vmatpush2.xpose.msra.mxu0 0.0
        %841 = vmatprep.subr.mxu0 0.0
        %842 = vmatpush2.xpose.msra.mxu0 0.0
        %843 = vmatprep.subr.mxu0 0.0
        %844 = vmatpush2.xpose.msra.mxu0 0.0
        %845 = vmatprep.subr.mxu0 0.0
        %846 = vmatpush2.xpose.msra.mxu0 0.0
        %847 = vmatprep.subr.mxu0 0.0
        %848 = vmatpush2.xpose.msra.mxu0 0.0
        %849 = vmatprep.subr.mxu0 0.0
        %850 = vmatpush2.xpose.msra.mxu0 0.0
        %851 = vmatprep.subr.mxu0 0.0
        %852 = vmatpush2.xpose.msra.mxu0 0.0
        %853 = vmatprep.subr.mxu0 0.0
        %854 = vmatpush2.xpose.msra.mxu0 0.0
        %855 = vmatprep.subr.mxu0 0.0
        %856 = vmatpush2.xpose.msra.mxu0 0.0
        %857 = vmatprep.subr.mxu0 0.0
        %858 = vmatpush2.xpose.msra.mxu0 0.0
        %859 = vmatprep.subr.mxu0 0.0
        %860 = vmatpush2.xpose.msra.mxu0 0.0
        %861 = vmatprep.mubr.f32.mxu0 0.0
        %862 = vmatmul.mubr.f32.gmra.mxu0 %v792
        %v863 = vpop.f32.mrf.mxu0
        %v864 = vadd.f32 0.0, %v863
        %v865 = vpop.f32.mrf.mxu0
        %866 = vdwg.mxu0
        %v867 = vsel %vm781, 16843009, 0
        %v868 = vunpack.c.0.s8 %v867
        %vm869 = vcmp.ne.s32.totalorder %v868, 0
        %v870 = vsel %vm869, -1e+09, %v864
        %vm871 = vcmask 64512
        %v872 = vsel %vm871, %v870, -inf
        %873 = vmax.xlane.f32.xlu0 %v872
        %v874 = vpop.xlane.xlu0 %873
        %v875 = vsub.f32 %v870, %v874
        %v876 = vmul.f32 %v875, 1.442695
        %v877 = vpow.pop %v876
        %v878 = vsel %vm871, %v877, 0.0
        %879 = vadd.xlane.f32.xlu0 %v878
        %v880 = vpop.xlane.xlu0 %879
        %v881 = vrcp.pop %v880
        %v882 = vmul.f32 1.0, %v881
        %v883 = vmul.f32 %v877, %v882
        %v885 = vsel %vm871, %v883, 0
        %887 = vmatprep.subr.mxu0 0.0
        %888 = vmatpush1.msra.mxu0 0.0
        %889 = vmatprep.subr.mxu0 0.0
        %890 = vmatpush1.msra.mxu0 0.0
        %891 = vmatprep.subr.mxu0 0.0
        %892 = vmatpush1.msra.mxu0 0.0
        %893 = vmatprep.subr.mxu0 0.0
        %894 = vmatpush1.msra.mxu0 0.0
        %895 = vmatprep.subr.mxu0 0.0
        %896 = vmatpush1.msra.mxu0 0.0
        %897 = vmatprep.subr.mxu0 0.0
        %898 = vmatpush1.msra.mxu0 0.0
        %899 = vmatprep.subr.mxu0 0.0
        %900 = vmatpush1.msra.mxu0 0.0
        %901 = vmatprep.subr.mxu0 0.0
        %902 = vmatpush1.msra.mxu0 0.0
        %903 = vmatprep.subr.mxu0 0.0
        %904 = vmatpush1.msra.mxu0 0.0
        %905 = vmatprep.subr.mxu0 0.0
        %906 = vmatpush1.msra.mxu0 0.0
        %907 = vmatprep.subr.mxu0 0.0
        %908 = vmatpush1.msra.mxu0 0.0
        %909 = vmatprep.subr.mxu0 0.0
        %910 = vmatpush1.msra.mxu0 0.0
        %911 = vmatprep.subr.mxu0 0.0
        %912 = vmatpush1.msra.mxu0 0.0
        %913 = vmatprep.subr.mxu0 0.0
        %914 = vmatpush1.msra.mxu0 0.0
        %915 = vmatprep.subr.mxu0 0.0
        %916 = vmatpush1.msra.mxu0 0.0
        %917 = vmatprep.subr.mxu0 0.0
        %918 = vmatpush1.msra.mxu0 %v777
        %919 = vmatprep.subr.mxu0 0.0
        %920 = vmatpush2.msra.mxu0 0.0
        %921 = vmatprep.subr.mxu0 0.0
        %922 = vmatpush2.msra.mxu0 0.0
        %923 = vmatprep.subr.mxu0 0.0
        %924 = vmatpush2.msra.mxu0 0.0
        %925 = vmatprep.subr.mxu0 0.0
        %926 = vmatpush2.msra.mxu0 0.0
        %927 = vmatprep.subr.mxu0 0.0
        %928 = vmatpush2.msra.mxu0 0.0
        %929 = vmatprep.subr.mxu0 0.0
        %930 = vmatpush2.msra.mxu0 0.0
        %931 = vmatprep.subr.mxu0 0.0
        %932 = vmatpush2.msra.mxu0 0.0
        %933 = vmatprep.subr.mxu0 0.0
        %934 = vmatpush2.msra.mxu0 0.0
        %935 = vmatprep.subr.mxu0 0.0
        %936 = vmatpush2.msra.mxu0 0.0
        %937 = vmatprep.subr.mxu0 0.0
        %938 = vmatpush2.msra.mxu0 0.0
        %939 = vmatprep.subr.mxu0 0.0
        %940 = vmatpush2.msra.mxu0 0.0
        %941 = vmatprep.subr.mxu0 0.0
        %942 = vmatpush2.msra.mxu0 0.0
        %943 = vmatprep.subr.mxu0 0.0
        %944 = vmatpush2.msra.mxu0 0.0
        %945 = vmatprep.subr.mxu0 0.0
        %946 = vmatpush2.msra.mxu0 0.0
        %947 = vmatprep.subr.mxu0 0.0
        %948 = vmatpush2.msra.mxu0 0.0
        %949 = vmatprep.subr.mxu0 0.0
        %950 = vmatpush2.msra.mxu0 0.0
        %951 = vmatprep.mubr.f32.mxu0 0.0
        %952 = vmatmul.mubr.f32.gmra.mxu0 %v885
        %v953 = vpop.f32.mrf.mxu0
        %v954 = vadd.f32 0.0, %v953
        %v955 = vpop.f32.mrf.mxu0
        %956 = vdwg.mxu0
        %v957 = vld [vmem:[#allocation10] sm:$0xff]
        %v958 = vld [vmem:[#allocation10 + $0x8] sm:$0xff]
        %v959 = vld [vmem:[#allocation10 + $0x10] sm:$0xff]
        %v960 = vld [vmem:[#allocation10 + $0x18] sm:$0xff]
        %v961 = vld [vmem:[#allocation10 + $0x20] sm:$0xff]
        %v962 = vld [vmem:[#allocation10 + $0x28] sm:$0xff]
        %v963 = vld [vmem:[#allocation10 + $0x30] sm:$0xff]
        %v964 = vld [vmem:[#allocation10 + $0x38] sm:$0xff]
        %v966 = vsel %vm790, %v954, 0
        %968 = vmatprep.subr.mxu0 0.0
        %969 = vmatpush1.msra.mxu0 0.0
        %970 = vmatprep.subr.mxu0 0.0
        %971 = vmatpush1.msra.mxu0 0.0
        %972 = vmatprep.subr.mxu0 0.0
        %973 = vmatpush1.msra.mxu0 0.0
        %974 = vmatprep.subr.mxu0 0.0
        %975 = vmatpush1.msra.mxu0 0.0
        %976 = vmatprep.subr.mxu0 0.0
        %977 = vmatpush1.msra.mxu0 0.0
        %978 = vmatprep.subr.mxu0 0.0
        %979 = vmatpush1.msra.mxu0 0.0
        %980 = vmatprep.subr.mxu0 0.0
        %981 = vmatpush1.msra.mxu0 0.0
        %982 = vmatprep.subr.mxu0 0.0
        %983 = vmatpush1.msra.mxu0 0.0
        %984 = vmatprep.subr.mxu0 0.0
        %985 = vmatpush1.msra.mxu0 %v964
        %986 = vmatprep.subr.mxu0 0.0
        %987 = vmatpush1.msra.mxu0 %v963
        %988 = vmatprep.subr.mxu0 0.0
        %989 = vmatpush1.msra.mxu0 %v962
        %990 = vmatprep.subr.mxu0 0.0
        %991 = vmatpush1.msra.mxu0 %v961
        %992 = vmatprep.subr.mxu0 0.0
        %993 = vmatpush1.msra.mxu0 %v960
        %994 = vmatprep.subr.mxu0 0.0
        %995 = vmatpush1.msra.mxu0 %v959
        %996 = vmatprep.subr.mxu0 0.0
        %997 = vmatpush1.msra.mxu0 %v958
        %998 = vmatprep.subr.mxu0 0.0
        %999 = vmatpush1.msra.mxu0 %v957
        %1000 = vmatprep.subr.mxu0 0.0
        %1001 = vmatpush2.msra.mxu0 0.0
        %1002 = vmatprep.subr.mxu0 0.0
        %1003 = vmatpush2.msra.mxu0 0.0
        %1004 = vmatprep.subr.mxu0 0.0
        %1005 = vmatpush2.msra.mxu0 0.0
        %1006 = vmatprep.subr.mxu0 0.0
        %1007 = vmatpush2.msra.mxu0 0.0
        %1008 = vmatprep.subr.mxu0 0.0
        %1009 = vmatpush2.msra.mxu0 0.0
        %1010 = vmatprep.subr.mxu0 0.0
        %1011 = vmatpush2.msra.mxu0 0.0
        %1012 = vmatprep.subr.mxu0 0.0
        %1013 = vmatpush2.msra.mxu0 0.0
        %1014 = vmatprep.subr.mxu0 0.0
        %1015 = vmatpush2.msra.mxu0 0.0
        %1016 = vmatprep.subr.mxu0 0.0
        %1017 = vmatpush2.msra.mxu0 0.0
        %1018 = vmatprep.subr.mxu0 0.0
        %1019 = vmatpush2.msra.mxu0 0.0
        %1020 = vmatprep.subr.mxu0 0.0
        %1021 = vmatpush2.msra.mxu0 0.0
        %1022 = vmatprep.subr.mxu0 0.0
        %1023 = vmatpush2.msra.mxu0 0.0
        %1024 = vmatprep.subr.mxu0 0.0
        %1025 = vmatpush2.msra.mxu0 0.0
        %1026 = vmatprep.subr.mxu0 0.0
        %1027 = vmatpush2.msra.mxu0 0.0
        %1028 = vmatprep.subr.mxu0 0.0
        %1029 = vmatpush2.msra.mxu0 0.0
        %1030 = vmatprep.subr.mxu0 0.0
        %1031 = vmatpush2.msra.mxu0 0.0
        %1032 = vmatprep.mubr.f32.mxu0 0.0
        %1033 = vmatmul.mubr.f32.gmra.mxu0 %v966
        %v1034 = vpop.f32.mrf.mxu0
        %v1035 = vadd.f32 0.0, %v1034
        %v1036 = vpop.f32.mrf.mxu0
        %1037 = vdwg.mxu0
        %v1038 = vadd.f32 %v789, %v1035
        %1039 = vrot.lane.b32.xlu0 %v587, 64
        %v1040 = vpop.permute.xlu0 %1039
        %1041 = vrot.lane.b32.xlu0 %v682, 64
        %v1042 = vpop.permute.xlu0 %1041
        %v1043 = vsel %vm790, %v1040, 0
        %v1045 = vsel %vm790, %v1042, 0
        %1047 = vmatprep.subr.mxu0 0.0
        %1048 = vmatpush1.xpose.msra.mxu0 0.0
        %1049 = vmatprep.subr.mxu0 0.0
        %1050 = vmatpush1.xpose.msra.mxu0 0.0
        %1051 = vmatprep.subr.mxu0 0.0
        %1052 = vmatpush1.xpose.msra.mxu0 0.0
        %1053 = vmatprep.subr.mxu0 0.0
        %1054 = vmatpush1.xpose.msra.mxu0 0.0
        %1055 = vmatprep.subr.mxu0 0.0
        %1056 = vmatpush1.xpose.msra.mxu0 0.0
        %1057 = vmatprep.subr.mxu0 0.0
        %1058 = vmatpush1.xpose.msra.mxu0 0.0
        %1059 = vmatprep.subr.mxu0 0.0
        %1060 = vmatpush1.xpose.msra.mxu0 0.0
        %1061 = vmatprep.subr.mxu0 0.0
        %1062 = vmatpush1.xpose.msra.mxu0 0.0
        %1063 = vmatprep.subr.mxu0 0.0
        %1064 = vmatpush1.xpose.msra.mxu0 0.0
        %1065 = vmatprep.subr.mxu0 0.0
        %1066 = vmatpush1.xpose.msra.mxu0 0.0
        %1067 = vmatprep.subr.mxu0 0.0
        %1068 = vmatpush1.xpose.msra.mxu0 0.0
        %1069 = vmatprep.subr.mxu0 0.0
        %1070 = vmatpush1.xpose.msra.mxu0 0.0
        %1071 = vmatprep.subr.mxu0 0.0
        %1072 = vmatpush1.xpose.msra.mxu0 0.0
        %1073 = vmatprep.subr.mxu0 0.0
        %1074 = vmatpush1.xpose.msra.mxu0 0.0
        %1075 = vmatprep.subr.mxu0 0.0
        %1076 = vmatpush1.xpose.msra.mxu0 0.0
        %1077 = vmatprep.subr.mxu0 0.0
        %1078 = vmatpush1.xpose.msra.mxu0 %v1045
        %1079 = vmatprep.subr.mxu0 0.0
        %1080 = vmatpush2.xpose.msra.mxu0 0.0
        %1081 = vmatprep.subr.mxu0 0.0
        %1082 = vmatpush2.xpose.msra.mxu0 0.0
        %1083 = vmatprep.subr.mxu0 0.0
        %1084 = vmatpush2.xpose.msra.mxu0 0.0
        %1085 = vmatprep.subr.mxu0 0.0
        %1086 = vmatpush2.xpose.msra.mxu0 0.0
        %1087 = vmatprep.subr.mxu0 0.0
        %1088 = vmatpush2.xpose.msra.mxu0 0.0
        %1089 = vmatprep.subr.mxu0 0.0
        %1090 = vmatpush2.xpose.msra.mxu0 0.0
        %1091 = vmatprep.subr.mxu0 0.0
        %1092 = vmatpush2.xpose.msra.mxu0 0.0
        %1093 = vmatprep.subr.mxu0 0.0
        %1094 = vmatpush2.xpose.msra.mxu0 0.0
        %1095 = vmatprep.subr.mxu0 0.0
        %1096 = vmatpush2.xpose.msra.mxu0 0.0
        %1097 = vmatprep.subr.mxu0 0.0
        %1098 = vmatpush2.xpose.msra.mxu0 0.0
        %1099 = vmatprep.subr.mxu0 0.0
        %1100 = vmatpush2.xpose.msra.mxu0 0.0
        %1101 = vmatprep.subr.mxu0 0.0
        %1102 = vmatpush2.xpose.msra.mxu0 0.0
        %1103 = vmatprep.subr.mxu0 0.0
        %1104 = vmatpush2.xpose.msra.mxu0 0.0
        %1105 = vmatprep.subr.mxu0 0.0
        %1106 = vmatpush2.xpose.msra.mxu0 0.0
        %1107 = vmatprep.subr.mxu0 0.0
        %1108 = vmatpush2.xpose.msra.mxu0 0.0
        %1109 = vmatprep.subr.mxu0 0.0
        %1110 = vmatpush2.xpose.msra.mxu0 0.0
        %1111 = vmatprep.mubr.f32.mxu0 0.0
        %1112 = vmatmul.mubr.f32.gmra.mxu0 %v1043
        %v1113 = vpop.f32.mrf.mxu0
        %v1114 = vadd.f32 0.0, %v1113
        %v1115 = vpop.f32.mrf.mxu0
        %1116 = vdwg.mxu0
        %v1117 = vsel %vm869, -1e+09, %v1114
        %v1118 = vsel %vm871, %v1117, -inf
        %1119 = vmax.xlane.f32.xlu0 %v1118
        %v1120 = vpop.xlane.xlu0 %1119
        %v1121 = vsub.f32 %v1117, %v1120
        %v1122 = vmul.f32 %v1121, 1.442695
        %v1123 = vpow.pop %v1122
        %v1124 = vsel %vm871, %v1123, 0.0
        %1125 = vadd.xlane.f32.xlu0 %v1124
        %v1126 = vpop.xlane.xlu0 %1125
        %v1127 = vrcp.pop %v1126
        %v1128 = vmul.f32 1.0, %v1127
        %v1129 = vmul.f32 %v1123, %v1128
        %1131 = vrot.lane.b32.xlu0 %v777, 64
        %v1132 = vpop.permute.xlu0 %1131
        %v1135 = vsel %vm871, %v1129, 0
        %1137 = vmatprep.subr.mxu0 0.0
        %1138 = vmatpush1.msra.mxu0 0.0
        %1139 = vmatprep.subr.mxu0 0.0
        %1140 = vmatpush1.msra.mxu0 0.0
        %1141 = vmatprep.subr.mxu0 0.0
        %1142 = vmatpush1.msra.mxu0 0.0
        %1143 = vmatprep.subr.mxu0 0.0
        %1144 = vmatpush1.msra.mxu0 0.0
        %1145 = vmatprep.subr.mxu0 0.0
        %1146 = vmatpush1.msra.mxu0 0.0
        %1147 = vmatprep.subr.mxu0 0.0
        %1148 = vmatpush1.msra.mxu0 0.0
        %1149 = vmatprep.subr.mxu0 0.0
        %1150 = vmatpush1.msra.mxu0 0.0
        %1151 = vmatprep.subr.mxu0 0.0
        %1152 = vmatpush1.msra.mxu0 0.0
        %1153 = vmatprep.subr.mxu0 0.0
        %1154 = vmatpush1.msra.mxu0 0.0
        %1155 = vmatprep.subr.mxu0 0.0
        %1156 = vmatpush1.msra.mxu0 0.0
        %1157 = vmatprep.subr.mxu0 0.0
        %1158 = vmatpush1.msra.mxu0 0.0
        %1159 = vmatprep.subr.mxu0 0.0
        %1160 = vmatpush1.msra.mxu0 0.0
        %1161 = vmatprep.subr.mxu0 0.0
        %1162 = vmatpush1.msra.mxu0 0.0
        %1163 = vmatprep.subr.mxu0 0.0
        %1164 = vmatpush1.msra.mxu0 0.0
        %1165 = vmatprep.subr.mxu0 0.0
        %1166 = vmatpush1.msra.mxu0 0.0
        %1167 = vmatprep.subr.mxu0 0.0
        %1168 = vmatpush1.msra.mxu0 %v1132
        %1169 = vmatprep.subr.mxu0 0.0
        %1170 = vmatpush2.msra.mxu0 0.0
        %1171 = vmatprep.subr.mxu0 0.0
        %1172 = vmatpush2.msra.mxu0 0.0
        %1173 = vmatprep.subr.mxu0 0.0
        %1174 = vmatpush2.msra.mxu0 0.0
        %1175 = vmatprep.subr.mxu0 0.0
        %1176 = vmatpush2.msra.mxu0 0.0
        %1177 = vmatprep.subr.mxu0 0.0
        %1178 = vmatpush2.msra.mxu0 0.0
        %1179 = vmatprep.subr.mxu0 0.0
        %1180 = vmatpush2.msra.mxu0 0.0
        %1181 = vmatprep.subr.mxu0 0.0
        %1182 = vmatpush2.msra.mxu0 0.0
        %1183 = vmatprep.subr.mxu0 0.0
        %1184 = vmatpush2.msra.mxu0 0.0
        %1185 = vmatprep.subr.mxu0 0.0
        %1186 = vmatpush2.msra.mxu0 0.0
        %1187 = vmatprep.subr.mxu0 0.0
        %1188 = vmatpush2.msra.mxu0 0.0
        %1189 = vmatprep.subr.mxu0 0.0
        %1190 = vmatpush2.msra.mxu0 0.0
        %1191 = vmatprep.subr.mxu0 0.0
        %1192 = vmatpush2.msra.mxu0 0.0
        %1193 = vmatprep.subr.mxu0 0.0
        %1194 = vmatpush2.msra.mxu0 0.0
        %1195 = vmatprep.subr.mxu0 0.0
        %1196 = vmatpush2.msra.mxu0 0.0
        %1197 = vmatprep.subr.mxu0 0.0
        %1198 = vmatpush2.msra.mxu0 0.0
        %1199 = vmatprep.subr.mxu0 0.0
        %1200 = vmatpush2.msra.mxu0 0.0
        %1201 = vmatprep.mubr.f32.mxu0 0.0
        %1202 = vmatmul.mubr.f32.gmra.mxu0 %v1135
        %v1203 = vpop.f32.mrf.mxu0
        %v1204 = vadd.f32 0.0, %v1203
        %v1205 = vpop.f32.mrf.mxu0
        %1206 = vdwg.mxu0
        %v1207 = vld [vmem:[#allocation10 + $0x40] sm:$0xff]
        %v1208 = vld [vmem:[#allocation10 + $0x48] sm:$0xff]
        %v1209 = vld [vmem:[#allocation10 + $0x50] sm:$0xff]
        %v1210 = vld [vmem:[#allocation10 + $0x58] sm:$0xff]
        %v1211 = vld [vmem:[#allocation10 + $0x60] sm:$0xff]
        %v1212 = vld [vmem:[#allocation10 + $0x68] sm:$0xff]
        %v1213 = vld [vmem:[#allocation10 + $0x70] sm:$0xff]
        %v1214 = vld [vmem:[#allocation10 + $0x78] sm:$0xff]
        %v1216 = vsel %vm790, %v1204, 0
        %1218 = vmatprep.subr.mxu0 0.0
        %1219 = vmatpush1.msra.mxu0 0.0
        %1220 = vmatprep.subr.mxu0 0.0
        %1221 = vmatpush1.msra.mxu0 0.0
        %1222 = vmatprep.subr.mxu0 0.0
        %1223 = vmatpush1.msra.mxu0 0.0
        %1224 = vmatprep.subr.mxu0 0.0
        %1225 = vmatpush1.msra.mxu0 0.0
        %1226 = vmatprep.subr.mxu0 0.0
        %1227 = vmatpush1.msra.mxu0 0.0
        %1228 = vmatprep.subr.mxu0 0.0
        %1229 = vmatpush1.msra.mxu0 0.0
        %1230 = vmatprep.subr.mxu0 0.0
        %1231 = vmatpush1.msra.mxu0 0.0
        %1232 = vmatprep.subr.mxu0 0.0
        %1233 = vmatpush1.msra.mxu0 0.0
        %1234 = vmatprep.subr.mxu0 0.0
        %1235 = vmatpush1.msra.mxu0 %v1214
        %1236 = vmatprep.subr.mxu0 0.0
        %1237 = vmatpush1.msra.mxu0 %v1213
        %1238 = vmatprep.subr.mxu0 0.0
        %1239 = vmatpush1.msra.mxu0 %v1212
        %1240 = vmatprep.subr.mxu0 0.0
        %1241 = vmatpush1.msra.mxu0 %v1211
        %1242 = vmatprep.subr.mxu0 0.0
        %1243 = vmatpush1.msra.mxu0 %v1210
        %1244 = vmatprep.subr.mxu0 0.0
        %1245 = vmatpush1.msra.mxu0 %v1209
        %1246 = vmatprep.subr.mxu0 0.0
        %1247 = vmatpush1.msra.mxu0 %v1208
        %1248 = vmatprep.subr.mxu0 0.0
        %1249 = vmatpush1.msra.mxu0 %v1207
        %1250 = vmatprep.subr.mxu0 0.0
        %1251 = vmatpush2.msra.mxu0 0.0
        %1252 = vmatprep.subr.mxu0 0.0
        %1253 = vmatpush2.msra.mxu0 0.0
        %1254 = vmatprep.subr.mxu0 0.0
        %1255 = vmatpush2.msra.mxu0 0.0
        %1256 = vmatprep.subr.mxu0 0.0
        %1257 = vmatpush2.msra.mxu0 0.0
        %1258 = vmatprep.subr.mxu0 0.0
        %1259 = vmatpush2.msra.mxu0 0.0
        %1260 = vmatprep.subr.mxu0 0.0
        %1261 = vmatpush2.msra.mxu0 0.0
        %1262 = vmatprep.subr.mxu0 0.0
        %1263 = vmatpush2.msra.mxu0 0.0
        %1264 = vmatprep.subr.mxu0 0.0
        %1265 = vmatpush2.msra.mxu0 0.0
        %1266 = vmatprep.subr.mxu0 0.0
        %1267 = vmatpush2.msra.mxu0 0.0
        %1268 = vmatprep.subr.mxu0 0.0
        %1269 = vmatpush2.msra.mxu0 0.0
        %1270 = vmatprep.subr.mxu0 0.0
        %1271 = vmatpush2.msra.mxu0 0.0
        %1272 = vmatprep.subr.mxu0 0.0
        %1273 = vmatpush2.msra.mxu0 0.0
        %1274 = vmatprep.subr.mxu0 0.0
        %1275 = vmatpush2.msra.mxu0 0.0
        %1276 = vmatprep.subr.mxu0 0.0
        %1277 = vmatpush2.msra.mxu0 0.0
        %1278 = vmatprep.subr.mxu0 0.0
        %1279 = vmatpush2.msra.mxu0 0.0
        %1280 = vmatprep.subr.mxu0 0.0
        %1281 = vmatpush2.msra.mxu0 0.0
        %1282 = vmatprep.mubr.f32.mxu0 0.0
        %1283 = vmatmul.mubr.f32.gmra.mxu0 %v1216
        %v1284 = vpop.f32.mrf.mxu0
        %v1285 = vadd.f32 0.0, %v1284
        %v1286 = vpop.f32.mrf.mxu0
        %1287 = vdwg.mxu0
        %v1288 = vadd.f32 %v1038, %v1285
        %1289 = vadd.xlane.f32.xlu0 %v1288
        %v1290 = vpop.xlane.xlu0 %1289
        %v1291 = vrcp.pop 128.0
        %v1292 = vmul.f32 %v1290, %v1291
        %v1293 = vsub.f32 %v1288, %v1292
        %v1294 = vmul.f32 %v1293, %v1293
        %1295 = vadd.xlane.f32.xlu0 %v1294
        %v1296 = vpop.xlane.xlu0 %1295
        %v1297 = vmul.f32 %v1296, %v1291
        %v1298 = vadd.f32 %v1297, 1e-05
        %v1299 = vrsqrt.pop %v1298
        %v1300 = vmul.f32 %v1293, %v1299
        %v1301 = vld [vmem:[%s8] sm:$0x1]
        %v1303 = vlaneseq
        %v1304 = vshrl.u32 %v1303, 7
        %v1305 = vsub.s32 0, %v1304
        %v1306 = vrot.slane %v1301, %v1305
        %v1308 = vmul.f32 %v1300, %v1306
        %v1309 = vld [vmem:[%s9] sm:$0x1]
        %v1311 = vlaneseq
        %v1312 = vshrl.u32 %v1311, 7
        %v1313 = vsub.s32 0, %v1312
        %v1314 = vrot.slane %v1309, %v1313
        %v1316 = vadd.f32 %v1308, %v1314
        %1317 = vst [vmem:[%s487] sm:$0xff] %v1316
        %s1318 = sand.u32 %s269, 1
        %s1319 = scalar_lea.sflag [#allocation4], %s1318
        %s1320 = sand.u32 %s269, 1
        %s1321 = smul.addr %s1320, 8
        %s1322 = scalar_lea.vmem [#allocation11], %s1321
        // Predicated region
        $region81: #{tpu_custom_call.1} parent=59 // pred_check
          %p1323 = pneg %p279
        $region82: #{tpu_custom_call.1} parent=59 // pred_check_branch
          %1325 = sbr.rel (%p1323) target = $region84
        $region83: #{tpu_custom_call.1} parent=59 // pred_region
          %s1327 = ssub.s32 128, 128
          %1328 = vsyncadd %s1319, %s1327
          %s1329 = smul.addr %s31, 128
          %s1330 = scalar_lea.hbm %s10, %s1329
          %s1332 = sshll.u32 %s1322, 4
          %s1333 = int_to_ptr.vmem [resolvable:$true] %s1332
          %1335 = dma.vmem_to_hbm [thread:$0]  %s1333, 128, %s1330, %s1319
        $region84: #{tpu_custom_call.1} parent=59 // pred_fallthru
          _
      $region60: #{tpu_custom_call.1} parent=5 // pred_fallthru
        _
      %p1336 = scmp.le.s32.totalorder 2, %s26
      // Predicated region
      $region85: #{tpu_custom_call.1} parent=5 // pred_check
        %p1337 = pneg %p1336
      $region86: #{tpu_custom_call.1} parent=5 // pred_check_branch
        %1339 = sbr.rel (%p1337) target = $region88
      $region87: #{tpu_custom_call.1} parent=5 // pred_region
        %s1340 = ssub.s32 %s26, 2
        // Predicated region
        $region89: #{tpu_custom_call.1} parent=87 // pred_check
          %p1341 = pneg %p285
        $region90: #{tpu_custom_call.1} parent=87 // pred_check_branch
          %1343 = sbr.rel (%p1341) target = $region92
        $region91: #{tpu_custom_call.1} parent=87 // pred_region
          %s1344 = sand.u32 %s270, 1
          %s1345 = scalar_lea.sflag [#allocation4], %s1344
          %s1346 = sand.u32 %s270, 1
          %s1347 = smul.addr %s1346, 8
          %s1348 = scalar_lea.vmem [#allocation11], %s1347
          %1349 = dma.done %s1345, 128
        $region92: #{tpu_custom_call.1} parent=87 // pred_fallthru
          _
      $region88: #{tpu_custom_call.1} parent=5 // pred_fallthru
        _
    $region6: #{tpu_custom_call.1} parent=1 // loop_footer
      %s30 = sadd.s32 1, %s26
    $region7: #{tpu_custom_call.1} parent=1 // loop_footer_branch
      %25 = sbr.rel target = $region3
    $region8: #{tpu_custom_call.1} parent=1 // loop_exit
      _
    %1350 = vsyncpa [#allocation3], 1
    %s1351 = scalar_lea.sflag [#allocation3], 1
    %1352 = vsyncpa %s1351, 1
    %1353 = vsyncpa [#allocation6], 1
    %s1354 = scalar_lea.sflag [#allocation6], 1
    %1355 = vsyncpa %s1354, 1
    %1356 = vsyncpa [#allocation9], 1
    %1357 = vsyncpa [#allocation4], 1
    %s1358 = scalar_lea.sflag [#allocation4], 1
    %1359 = vsyncpa %s1358, 1

</llo_original>
